<compile_context>
chip_gen: v7x
topology: tpu7x:2x2x1
jax: 0.10.0
libtpu: 0.0.40
codegen_flags: <defaults>
</compile_context>

<pallas_src>
import functools

import jax
import jax.numpy as jnp
from jax.experimental import pallas as pl
from jax.experimental.pallas import tpu as pltpu


INPUT_DIM = 3
EMBED_DIM = 64


def tnet_kernel(x_ref,
                w1_ref, b1_ref,
                w2_ref, b2_ref,
                w3_ref, b3_ref,
                fw1_ref, fb1_ref,
                fw2_ref, fb2_ref,
                fw3_ref, fb3_ref,
                eye_ref,
                out_ref,
                gmax_ref,
                *, n_total, has_remainder):
    """One grid step = TB batch elements x TN points. Weights are (in, out)."""
    tb, c_pad, tn = x_ref.shape
    d3 = w3_ref.shape[1]
    k = pl.program_id(1)
    nk = pl.num_programs(1)

    # conv1 (1x1) + folded bn1 + relu, on the MXU.
    # x arrives channels-first (TB, 8, TN): points on the lane axis means a
    # compact VMEM block and contiguous DMA.  The small aligned (8, TN) slab is
    # transposed in-kernel and fed to the MXU; zero-padded channels contribute 0.
    x = x_ref[...]                                            # (TB, 8, TN) f32
    xt = jnp.swapaxes(x, 1, 2).reshape(tb * tn, c_pad)        # (TB*TN, 8) f32
    h1 = jnp.maximum(
        jnp.dot(xt, w1_ref[...], preferred_element_type=jnp.float32)
        + b1_ref[...], 0.0)                                   # (TB*TN, D1) f32

    # conv2 (1x1) + folded bn2 + relu — bf16 MXU matmul, f32 accumulation.
    h2 = jnp.maximum(
        jnp.dot(h1.astype(jnp.bfloat16), w2_ref[...],
                preferred_element_type=jnp.float32)
        + b2_ref[...], 0.0)                                   # (TB*TN, D2) f32

    # conv3 (1x1): raw dot output only — bias + relu are hoisted past the
    # points-max and applied once in the final-k branch.  Output dtype follows
    # the gmax scratch (bf16 on v6e/v7x, f32 on v5e).
    h3 = jnp.dot(h2.astype(jnp.bfloat16), w3_ref[...],
                 preferred_element_type=gmax_ref.dtype)       # (TB*TN, D3)
    h3 = h3.reshape(tb, tn, d3)

    @pl.when(k == 0)
    def _init():
        gmax_ref[...] = jnp.full(gmax_ref.shape, -jnp.inf, dtype=gmax_ref.dtype)

    # torch.max(x, 2): running max over the tiled points axis.  The padded-point
    # mask is only materialised when the last tile is actually partial.
    if has_remainder:
        @pl.when(k == nk - 1)
        def _masked_max():
            pidx = jax.lax.broadcasted_iota(jnp.int32, (1, tn, 1), 1)
            valid = (k * tn + pidx) < n_total
            neg = jnp.asarray(-jnp.inf, dtype=h3.dtype)
            g_tile = jnp.max(jnp.where(valid, h3, neg), axis=1)
            gmax_ref[...] = jnp.maximum(gmax_ref[...], g_tile)

        @pl.when(k < nk - 1)
        def _full_max():
            gmax_ref[...] = jnp.maximum(gmax_ref[...], jnp.max(h3, axis=1))
    else:
        gmax_ref[...] = jnp.maximum(gmax_ref[...], jnp.max(h3, axis=1))

    # Batched FC tail (M = TB) + identity, emitted on the last points tile.
    @pl.when(k == nk - 1)
    def _tail():
        # hoisted conv3 bias + relu (per-channel, commutes with the max)
        g = jnp.maximum(gmax_ref[...].astype(jnp.float32) + b3_ref[...], 0.0)
        f1 = jnp.maximum(
            jnp.dot(g.astype(jnp.bfloat16), fw1_ref[...],
                    preferred_element_type=jnp.float32) + fb1_ref[...], 0.0)
        f2 = jnp.maximum(
            jnp.dot(f1.astype(jnp.bfloat16), fw2_ref[...],
                    preferred_element_type=jnp.float32) + fb2_ref[...], 0.0)
        m = jnp.dot(f2.astype(jnp.bfloat16), fw3_ref[...],
                    preferred_element_type=jnp.float32) + fb3_ref[...]
        out_ref[...] = m + eye_ref[...]                       # (TB, C_in^2)


def _const_spec(shape):
    # whole-array block, independent of both grid axes
    nd = len(shape)
    return pl.BlockSpec(shape, lambda b, k, _nd=nd: (0,) * _nd)


def _tpu_kind():
    try:
        return jax.devices()[0].device_kind.lower()
    except Exception:
        return ""


def tnet_forward(x_ncl, params, *, tb=16, tn=512, h3_dtype=None):
    """x_ncl: (B, input_dim, N) float32 — same layout as the PyTorch module."""
    B, C_in, N = x_ncl.shape
    (w1, b1, w2, b2, w3, b3, fw1, fb1, fw2, fb2, fw3, fb3, eye_flat) = params
    d1, d2, d3 = w1.shape[1], w2.shape[1], w3.shape[1]
    out_dim = fw3.shape[1]

    kind = _tpu_kind()
    is_v7 = ("v7" in kind) or ("tpu7" in kind) or ("7x" in kind)
    has_bf16_vpu = is_v7 or ("v6" in kind) or ("tpu6" in kind)
    if h3_dtype is None:
        # bf16 conv3 epilogue where the VPU supports it; f32 on v5e / older.
        h3_dtype = jnp.bfloat16 if has_bf16_vpu else jnp.float32

    # ---- tile selection -----------------------------------------------------
    # batch tile: TB == B (full axis) or a multiple of 8
    tb = B if B <= tb else max(8, (tb // 8) * 8)
    # points tile: TN == N (full axis) or a multiple of 128 (lane axis)
    tn = N if N <= tn else max(128, (tn // 128) * 128)
    # v7x has two TensorCores: keep >= 2 blocks on the "parallel" batch axis.
    if is_v7 and B >= 16:
        tb = min(tb, max(8, (B // 16) * 8))
    # Row cap so activations (+ double-buffered x) fit scoped VMEM; v7x has
    # only 64 MiB physical VMEM.
    max_rows = 8192 if is_v7 else 16384
    while tb * tn > max_rows and tn > 128 and tn != N:
        tn //= 2
    while tb * tn > max_rows and tb > 8 and tb != B:
        tb = max(8, tb // 2)

    grid = (pl.cdiv(B, tb), pl.cdiv(N, tn))
    has_remainder = (N % tn) != 0

    # ---- channel padding: align conv1's K to the sublane width (8) ----------
    c_pad = max(8, ((C_in + 7) // 8) * 8)
    if c_pad != C_in:
        x_ncl = jnp.pad(x_ncl, ((0, 0), (0, c_pad - C_in), (0, 0)))
        w1 = jnp.pad(w1, ((0, c_pad - C_in), (0, 0)))

    in_specs = [
        pl.BlockSpec((tb, c_pad, tn), lambda b, k: (b, 0, k)),   # x (NCL, tiled)
        _const_spec(w1.shape), _const_spec(b1.shape),
        _const_spec(w2.shape), _const_spec(b2.shape),
        _const_spec(w3.shape), _const_spec(b3.shape),
        _const_spec(fw1.shape), _const_spec(fb1.shape),
        _const_spec(fw2.shape), _const_spec(fb2.shape),
        _const_spec(fw3.shape), _const_spec(fb3.shape),
        _const_spec(eye_flat.shape),
    ]
    out_spec = pl.BlockSpec((tb, out_dim), lambda b, k: (b, 0))

    # ---- VMEM budget from tile arithmetic -----------------------------------
    rows = tb * tn
    h3_item = jnp.dtype(h3_dtype).itemsize
    act_bytes = rows * (4 * 128            # xt (rows, 8)  f32, lane-padded
                        + 4 * 128          # h1 (rows, 64) f32, lane-padded
                        + 2 * d1           # h1 bf16 copy
                        + 4 * d2 + 2 * d2  # h2 f32 + bf16 copy
                        + h3_item * d3)    # h3
    weights = (w1, b1, w2, b2, w3, b3, fw1, fb1, fw2, fb2, fw3, fb3, eye_flat)
    weight_bytes = sum(int(a.size) * a.dtype.itemsize for a in weights)
    x_bytes = 2 * 4 * tb * c_pad * tn      # double-buffered input block
    vmem_cap = (48 << 20) if is_v7 else (96 << 20)
    vmem_limit = int(min(max(act_bytes + 2 * weight_bytes + x_bytes + (8 << 20),
                             32 << 20), vmem_cap))

    flops = (2 * B * N * (C_in * d1 + d1 * d2 + d2 * d3)
             + 2 * B * (d3 * d2 + d2 * d1 + d1 * out_dim))
    bytes_accessed = int(x_ncl.size) * 4 + B * out_dim * 4 + weight_bytes
    cost = pl.CostEstimate(flops=int(flops), transcendentals=0,
                           bytes_accessed=int(bytes_accessed))

    kernel = functools.partial(tnet_kernel, n_total=N,
                               has_remainder=has_remainder)

    out_flat = pl.pallas_call(
        kernel,
        out_shape=jax.ShapeDtypeStruct((B, out_dim), jnp.float32),
        grid=grid,
        in_specs=in_specs,
        out_specs=out_spec,
        scratch_shapes=[pltpu.VMEM((tb, d3), h3_dtype)],      # running points-max
        compiler_params=pltpu.CompilerParams(
            dimension_semantics=("parallel", "arbitrary"),
            vmem_limit_bytes=vmem_limit),
        cost_estimate=cost,
    )(x_ncl, w1, b1, w2, b2, w3, b3, fw1, fb1, fw2, fb2, fw3, fb3, eye_flat)

    return out_flat.reshape(B, C_in, C_in)                    # (B, 3, 3)


# ---------------------------------------------------------------------------
# Deterministic parameter construction (plain-JAX glue).
# ---------------------------------------------------------------------------
def _fold_bn(w_io, b, eps=1e-5):
    """Fold eval-mode BatchNorm (default init) into a (in,out) weight + bias."""
    out_dim = w_io.shape[1]
    gamma = jnp.ones((out_dim,), jnp.float32)
    beta = jnp.zeros((out_dim,), jnp.float32)
    mean = jnp.zeros((out_dim,), jnp.float32)
    var = jnp.ones((out_dim,), jnp.float32)
    scale = gamma / jnp.sqrt(var + eps)
    w_f = w_io * scale[None, :]
    b_f = (b - mean) * scale + beta
    return w_f, b_f


def make_params(key, input_dim=INPUT_DIM, embed_dim=EMBED_DIM):
    d1, d2, d3 = embed_dim, embed_dim * 2, embed_dim * 8

    def layer(k, fan_in, fan_out, zero=False):
        if zero:
            return (jnp.zeros((fan_in, fan_out), jnp.float32),
                    jnp.zeros((fan_out,), jnp.float32))
        kw, kb = jax.random.split(k)
        bound = 1.0 / jnp.sqrt(fan_in)
        w = jax.random.uniform(kw, (fan_in, fan_out), jnp.float32, -bound, bound)
        b = jax.random.uniform(kb, (fan_out,), jnp.float32, -bound, bound)
        return w, b

    ks = jax.random.split(key, 6)
    w1, b1 = layer(ks[0], input_dim, d1)       # conv1 (1x1)
    w2, b2 = layer(ks[1], d1, d2)              # conv2 (1x1)
    w3, b3 = layer(ks[2], d2, d3)              # conv3 (1x1)
    fw1, fb1 = layer(ks[3], d3, d2)            # fc1
    fw2, fb2 = layer(ks[4], d2, d1)            # fc2
    fw3, fb3 = layer(ks[5], d1, input_dim * input_dim, zero=True)  # fc3 zeroed

    # fold BN1..BN5 (eval-mode, default-initialised running stats)
    w1, b1 = _fold_bn(w1, b1)
    w2, b2 = _fold_bn(w2, b2)
    w3, b3 = _fold_bn(w3, b3)
    fw1, fb1 = _fold_bn(fw1, fb1)
    fw2, fb2 = _fold_bn(fw2, fb2)

    # MXU-side weights in bf16 (f32 accumulation in-kernel); w1 stays f32 for
    # the f32 conv1 MXU dot; biases stay f32 and are kept 2D (1, C).
    bf16 = lambda a: a.astype(jnp.bfloat16)
    w2, w3, fw1, fw2, fw3 = map(bf16, (w2, w3, fw1, fw2, fw3))

    as2d = lambda v: v.reshape(1, -1)
    eye_flat = jnp.eye(input_dim, dtype=jnp.float32).reshape(1, input_dim * input_dim)

    return (w1, as2d(b1), w2, as2d(b2), w3, as2d(b3),
            fw1, as2d(fb1), fw2, as2d(fb2), fw3, as2d(fb3), eye_flat)


if __name__ == "__main__":
    key = jax.random.PRNGKey(0)
    k_x, k_p = jax.random.split(key)

    B, N = 2, 16
    x = jax.random.normal(k_x, (B, INPUT_DIM, N), jnp.float32)   # (B, 3, N), NCL
    params = make_params(k_p)

    out = tnet_forward(x, params)
    out = jax.block_until_ready(out)

    assert out.shape == (B, INPUT_DIM, INPUT_DIM), out.shape
    # fc3 is zero-initialised, so the T-net must output the identity per batch.
    expected = jnp.broadcast_to(jnp.eye(INPUT_DIM, dtype=jnp.float32),
                                (B, INPUT_DIM, INPUT_DIM))
    assert jnp.allclose(out, expected, atol=1e-5), out

    print("KERNEL_OK")
</pallas_src>

<mosaic_0001>
module attributes {stable_mosaic.version = 11 : i64} {
  func.func @tnet_kernel(%arg0: i32, %arg1: i32, %arg2: memref<2x8x16xf32, #tpu.memory_space<vmem>>, %arg3: memref<8x64xf32, #tpu.memory_space<vmem>>, %arg4: memref<1x64xf32, #tpu.memory_space<vmem>>, %arg5: memref<64x128xbf16, #tpu.memory_space<vmem>>, %arg6: memref<1x128xf32, #tpu.memory_space<vmem>>, %arg7: memref<128x512xbf16, #tpu.memory_space<vmem>>, %arg8: memref<1x512xf32, #tpu.memory_space<vmem>>, %arg9: memref<512x128xbf16, #tpu.memory_space<vmem>>, %arg10: memref<1x128xf32, #tpu.memory_space<vmem>>, %arg11: memref<128x64xbf16, #tpu.memory_space<vmem>>, %arg12: memref<1x64xf32, #tpu.memory_space<vmem>>, %arg13: memref<64x9xbf16, #tpu.memory_space<vmem>>, %arg14: memref<1x9xf32, #tpu.memory_space<vmem>>, %arg15: memref<1x9xf32, #tpu.memory_space<vmem>>, %arg16: memref<2x9xf32, #tpu.memory_space<vmem>>, %arg17: memref<2x512xf32, #tpu.memory_space<vmem>>) attributes {dimension_semantics = [#tpu.dimension_semantics<parallel>, #tpu.dimension_semantics<arbitrary>], iteration_bounds = array<i64: 1, 1>, scalar_prefetch = 0 : i64, scratch_operands = 1 : i64, tpu.core_type = #tpu.core_type<tc>, window_params = [{transform_indices = @transform_0, window_bounds = array<i64: 2, 8, 16>}, {pipeline_mode = #tpu.pipeline_mode<synchronous>, transform_indices = @transform_1, window_bounds = array<i64: 8, 64>}, {pipeline_mode = #tpu.pipeline_mode<synchronous>, transform_indices = @transform_2, window_bounds = array<i64: 1, 64>}, {pipeline_mode = #tpu.pipeline_mode<synchronous>, transform_indices = @transform_3, window_bounds = array<i64: 64, 128>}, {pipeline_mode = #tpu.pipeline_mode<synchronous>, transform_indices = @transform_4, window_bounds = array<i64: 1, 128>}, {pipeline_mode = #tpu.pipeline_mode<synchronous>, transform_indices = @transform_5, window_bounds = array<i64: 128, 512>}, {pipeline_mode = #tpu.pipeline_mode<synchronous>, transform_indices = @transform_6, window_bounds = array<i64: 1, 512>}, {pipeline_mode = #tpu.pipeline_mode<synchronous>, transform_indices = @transform_7, window_bounds = array<i64: 512, 128>}, {pipeline_mode = #tpu.pipeline_mode<synchronous>, transform_indices = @transform_8, window_bounds = array<i64: 1, 128>}, {pipeline_mode = #tpu.pipeline_mode<synchronous>, transform_indices = @transform_9, window_bounds = array<i64: 128, 64>}, {pipeline_mode = #tpu.pipeline_mode<synchronous>, transform_indices = @transform_10, window_bounds = array<i64: 1, 64>}, {pipeline_mode = #tpu.pipeline_mode<synchronous>, transform_indices = @transform_11, window_bounds = array<i64: 64, 9>}, {pipeline_mode = #tpu.pipeline_mode<synchronous>, transform_indices = @transform_12, window_bounds = array<i64: 1, 9>}, {pipeline_mode = #tpu.pipeline_mode<synchronous>, transform_indices = @transform_13, window_bounds = array<i64: 1, 9>}, {transform_indices = @transform_14, window_bounds = array<i64: 2, 9>}]} {
    %c0 = arith.constant 0 : index
    %c0_0 = arith.constant 0 : index
    %c0_1 = arith.constant 0 : index
    %0 = vector.load %arg2[%c0, %c0_0, %c0_1] : memref<2x8x16xf32, #tpu.memory_space<vmem>>, vector<2x8x16xf32>
    %1 = tpu.transpose %0, [0, 2, 1] : vector<2x8x16xf32> -> vector<2x16x8xf32>
    %2 = vector.shape_cast %1 : vector<2x16x8xf32> to vector<32x8xf32>
    %c0_2 = arith.constant 0 : index
    %c0_3 = arith.constant 0 : index
    %3 = vector.load %arg3[%c0_2, %c0_3] : memref<8x64xf32, #tpu.memory_space<vmem>>, vector<8x64xf32>
    %cst = arith.constant dense<0.000000e+00> : vector<32x64xf32>
    %4 = tpu.matmul %2, %3, %cst {dimension_numbers = #tpu.dot_dimension_numbers<[1], [0], [0], [1], [0, 0, 1, 1], [], []>} : vector<32x8xf32>, vector<8x64xf32>, vector<32x64xf32> -> vector<32x64xf32>
    %c0_4 = arith.constant 0 : index
    %c0_5 = arith.constant 0 : index
    %5 = vector.load %arg4[%c0_4, %c0_5] : memref<1x64xf32, #tpu.memory_space<vmem>>, vector<1x64xf32>
    %6 = vector.broadcast %5 : vector<1x64xf32> to vector<32x64xf32>
    %7 = arith.addf %4, %6 : vector<32x64xf32>
    %cst_6 = arith.constant 0.000000e+00 : f32
    %8 = vector.broadcast %cst_6 : f32 to vector<32x64xf32>
    %9 = arith.maximumf %7, %8 : vector<32x64xf32>
    %10 = arith.truncf %9 : vector<32x64xf32> to vector<32x64xbf16>
    %c0_7 = arith.constant 0 : index
    %c0_8 = arith.constant 0 : index
    %11 = vector.load %arg5[%c0_7, %c0_8] : memref<64x128xbf16, #tpu.memory_space<vmem>>, vector<64x128xbf16>
    %cst_9 = arith.constant dense<0.000000e+00> : vector<32x128xf32>
    %12 = tpu.matmul %10, %11, %cst_9 {dimension_numbers = #tpu.dot_dimension_numbers<[1], [0], [0], [1], [0, 0, 1, 1], [], []>} : vector<32x64xbf16>, vector<64x128xbf16>, vector<32x128xf32> -> vector<32x128xf32>
    %c0_10 = arith.constant 0 : index
    %c0_11 = arith.constant 0 : index
    %13 = vector.load %arg6[%c0_10, %c0_11] : memref<1x128xf32, #tpu.memory_space<vmem>>, vector<1x128xf32>
    %14 = vector.broadcast %13 : vector<1x128xf32> to vector<32x128xf32>
    %15 = arith.addf %12, %14 : vector<32x128xf32>
    %cst_12 = arith.constant 0.000000e+00 : f32
    %16 = vector.broadcast %cst_12 : f32 to vector<32x128xf32>
    %17 = arith.maximumf %15, %16 : vector<32x128xf32>
    %18 = arith.truncf %17 : vector<32x128xf32> to vector<32x128xbf16>
    %c0_13 = arith.constant 0 : index
    %c0_14 = arith.constant 0 : index
    %19 = vector.load %arg7[%c0_13, %c0_14] : memref<128x512xbf16, #tpu.memory_space<vmem>>, vector<128x512xbf16>
    %cst_15 = arith.constant dense<0.000000e+00> : vector<32x512xf32>
    %20 = tpu.matmul %18, %19, %cst_15 {dimension_numbers = #tpu.dot_dimension_numbers<[1], [0], [0], [1], [0, 0, 1, 1], [], []>} : vector<32x128xbf16>, vector<128x512xbf16>, vector<32x512xf32> -> vector<32x512xf32>
    %21 = vector.shape_cast %20 : vector<32x512xf32> to vector<2x16x512xf32>
    %c0_i32 = arith.constant 0 : i32
    %22 = arith.cmpi eq, %arg1, %c0_i32 : i32
    %23 = arith.extui %22 : i1 to i32
    %c0_i32_16 = arith.constant 0 : i32
    %24 = arith.cmpi ne, %23, %c0_i32_16 : i32
    scf.if %24 {
      %cst_24 = arith.constant 0xFF800000 : f32
      %32 = vector.broadcast %cst_24 : f32 to vector<2x512xf32>
      %c0_25 = arith.constant 0 : index
      %c0_26 = arith.constant 0 : index
      %33 = vector.load %arg17[%c0_25, %c0_26] : memref<2x512xf32, #tpu.memory_space<vmem>>, vector<2x512xf32>
      tpu.vector_store %arg17[%c0_25, %c0_26], %32 {strides = array<i32>} : memref<2x512xf32, #tpu.memory_space<vmem>>, vector<2x512xf32>,
    } else {
    }
    %c0_17 = arith.constant 0 : index
    %c0_18 = arith.constant 0 : index
    %25 = vector.load %arg17[%c0_17, %c0_18] : memref<2x512xf32, #tpu.memory_space<vmem>>, vector<2x512xf32>
    %cst_19 = arith.constant dense<0xFF800000> : vector<2x512xf32>
    %26 = vector.multi_reduction <maximumf>, %21, %cst_19 [1] : vector<2x16x512xf32> to vector<2x512xf32>
    %27 = arith.maximumf %25, %26 : vector<2x512xf32>
    %c0_20 = arith.constant 0 : index
    %c0_21 = arith.constant 0 : index
    %28 = vector.load %arg17[%c0_20, %c0_21] : memref<2x512xf32, #tpu.memory_space<vmem>>, vector<2x512xf32>
    tpu.vector_store %arg17[%c0_20, %c0_21], %27 {strides = array<i32>} : memref<2x512xf32, #tpu.memory_space<vmem>>, vector<2x512xf32>,
    %c0_i32_22 = arith.constant 0 : i32
    %29 = arith.cmpi eq, %arg1, %c0_i32_22 : i32
    %30 = arith.extui %29 : i1 to i32
    %c0_i32_23 = arith.constant 0 : i32
    %31 = arith.cmpi ne, %30, %c0_i32_23 : i32
    scf.if %31 {
      %c0_24 = arith.constant 0 : index
      %c0_25 = arith.constant 0 : index
      %32 = vector.load %arg17[%c0_24, %c0_25] : memref<2x512xf32, #tpu.memory_space<vmem>>, vector<2x512xf32>
      %c0_26 = arith.constant 0 : index
      %c0_27 = arith.constant 0 : index
      %33 = vector.load %arg8[%c0_26, %c0_27] : memref<1x512xf32, #tpu.memory_space<vmem>>, vector<1x512xf32>
      %34 = vector.broadcast %33 : vector<1x512xf32> to vector<2x512xf32>
      %35 = arith.addf %32, %34 : vector<2x512xf32>
      %cst_28 = arith.constant 0.000000e+00 : f32
      %36 = vector.broadcast %cst_28 : f32 to vector<2x512xf32>
      %37 = arith.maximumf %35, %36 : vector<2x512xf32>
      %38 = arith.truncf %37 : vector<2x512xf32> to vector<2x512xbf16>
      %c0_29 = arith.constant 0 : index
      %c0_30 = arith.constant 0 : index
      %39 = vector.load %arg9[%c0_29, %c0_30] : memref<512x128xbf16, #tpu.memory_space<vmem>>, vector<512x128xbf16>
      %cst_31 = arith.constant dense<0.000000e+00> : vector<2x128xf32>
      %40 = tpu.matmul %38, %39, %cst_31 {dimension_numbers = #tpu.dot_dimension_numbers<[1], [0], [0], [1], [0, 0, 1, 1], [], []>} : vector<2x512xbf16>, vector<512x128xbf16>, vector<2x128xf32> -> vector<2x128xf32>
      %c0_32 = arith.constant 0 : index
      %c0_33 = arith.constant 0 : index
      %41 = vector.load %arg10[%c0_32, %c0_33] : memref<1x128xf32, #tpu.memory_space<vmem>>, vector<1x128xf32>
      %42 = vector.broadcast %41 : vector<1x128xf32> to vector<2x128xf32>
      %43 = arith.addf %40, %42 : vector<2x128xf32>
      %cst_34 = arith.constant 0.000000e+00 : f32
      %44 = vector.broadcast %cst_34 : f32 to vector<2x128xf32>
      %45 = arith.maximumf %43, %44 : vector<2x128xf32>
      %46 = arith.truncf %45 : vector<2x128xf32> to vector<2x128xbf16>
      %c0_35 = arith.constant 0 : index
      %c0_36 = arith.constant 0 : index
      %47 = vector.load %arg11[%c0_35, %c0_36] : memref<128x64xbf16, #tpu.memory_space<vmem>>, vector<128x64xbf16>
      %cst_37 = arith.constant dense<0.000000e+00> : vector<2x64xf32>
      %48 = tpu.matmul %46, %47, %cst_37 {dimension_numbers = #tpu.dot_dimension_numbers<[1], [0], [0], [1], [0, 0, 1, 1], [], []>} : vector<2x128xbf16>, vector<128x64xbf16>, vector<2x64xf32> -> vector<2x64xf32>
      %c0_38 = arith.constant 0 : index
      %c0_39 = arith.constant 0 : index
      %49 = vector.load %arg12[%c0_38, %c0_39] : memref<1x64xf32, #tpu.memory_space<vmem>>, vector<1x64xf32>
      %50 = vector.broadcast %49 : vector<1x64xf32> to vector<2x64xf32>
      %51 = arith.addf %48, %50 : vector<2x64xf32>
      %cst_40 = arith.constant 0.000000e+00 : f32
      %52 = vector.broadcast %cst_40 : f32 to vector<2x64xf32>
      %53 = arith.maximumf %51, %52 : vector<2x64xf32>
      %54 = arith.truncf %53 : vector<2x64xf32> to vector<2x64xbf16>
      %c0_41 = arith.constant 0 : index
      %c0_42 = arith.constant 0 : index
      %55 = vector.load %arg13[%c0_41, %c0_42] : memref<64x9xbf16, #tpu.memory_space<vmem>>, vector<64x9xbf16>
      %cst_43 = arith.constant dense<0.000000e+00> : vector<2x9xf32>
      %56 = tpu.matmul %54, %55, %cst_43 {dimension_numbers = #tpu.dot_dimension_numbers<[1], [0], [0], [1], [0, 0, 1, 1], [], []>} : vector<2x64xbf16>, vector<64x9xbf16>, vector<2x9xf32> -> vector<2x9xf32>
      %c0_44 = arith.constant 0 : index
      %c0_45 = arith.constant 0 : index
      %57 = vector.load %arg14[%c0_44, %c0_45] : memref<1x9xf32, #tpu.memory_space<vmem>>, vector<1x9xf32>
      %58 = vector.broadcast %57 : vector<1x9xf32> to vector<2x9xf32>
      %59 = arith.addf %56, %58 : vector<2x9xf32>
      %c0_46 = arith.constant 0 : index
      %c0_47 = arith.constant 0 : index
      %60 = vector.load %arg15[%c0_46, %c0_47] : memref<1x9xf32, #tpu.memory_space<vmem>>, vector<1x9xf32>
      %61 = vector.broadcast %60 : vector<1x9xf32> to vector<2x9xf32>
      %62 = arith.addf %59, %61 : vector<2x9xf32>
      %c0_48 = arith.constant 0 : index
      %c0_49 = arith.constant 0 : index
      %63 = vector.load %arg16[%c0_48, %c0_49] : memref<2x9xf32, #tpu.memory_space<vmem>>, vector<2x9xf32>
      tpu.vector_store %arg16[%c0_48, %c0_49], %62 {strides = array<i32>} : memref<2x9xf32, #tpu.memory_space<vmem>>, vector<2x9xf32>,
    } else {
    }
    return
  }
  func.func @transform_0(%arg0: i32, %arg1: i32) -> (i32, i32, i32) {
    %c0_i32 = arith.constant 0 : i32
    %c0_i32_0 = arith.constant 0 : i32
    return %arg0, %c0_i32, %arg1 : i32, i32, i32
  }
  func.func @transform_1(%arg0: i32, %arg1: i32) -> (i32, i32) {
    %c0_i32 = arith.constant 0 : i32
    %c0_i32_0 = arith.constant 0 : i32
    %c0_i32_1 = arith.constant 0 : i32
    return %c0_i32, %c0_i32_0 : i32, i32
  }
  func.func @transform_2(%arg0: i32, %arg1: i32) -> (i32, i32) {
    %c0_i32 = arith.constant 0 : i32
    %c0_i32_0 = arith.constant 0 : i32
    %c0_i32_1 = arith.constant 0 : i32
    return %c0_i32, %c0_i32_0 : i32, i32
  }
  func.func @transform_3(%arg0: i32, %arg1: i32) -> (i32, i32) {
    %c0_i32 = arith.constant 0 : i32
    %c0_i32_0 = arith.constant 0 : i32
    %c0_i32_1 = arith.constant 0 : i32
    return %c0_i32, %c0_i32_0 : i32, i32
  }
  func.func @transform_4(%arg0: i32, %arg1: i32) -> (i32, i32) {
    %c0_i32 = arith.constant 0 : i32
    %c0_i32_0 = arith.constant 0 : i32
    %c0_i32_1 = arith.constant 0 : i32
    return %c0_i32, %c0_i32_0 : i32, i32
  }
  func.func @transform_5(%arg0: i32, %arg1: i32) -> (i32, i32) {
    %c0_i32 = arith.constant 0 : i32
    %c0_i32_0 = arith.constant 0 : i32
    %c0_i32_1 = arith.constant 0 : i32
    return %c0_i32, %c0_i32_0 : i32, i32
  }
  func.func @transform_6(%arg0: i32, %arg1: i32) -> (i32, i32) {
    %c0_i32 = arith.constant 0 : i32
    %c0_i32_0 = arith.constant 0 : i32
    %c0_i32_1 = arith.constant 0 : i32
    return %c0_i32, %c0_i32_0 : i32, i32
  }
  func.func @transform_7(%arg0: i32, %arg1: i32) -> (i32, i32) {
    %c0_i32 = arith.constant 0 : i32
    %c0_i32_0 = arith.constant 0 : i32
    %c0_i32_1 = arith.constant 0 : i32
    return %c0_i32, %c0_i32_0 : i32, i32
  }
  func.func @transform_8(%arg0: i32, %arg1: i32) -> (i32, i32) {
    %c0_i32 = arith.constant 0 : i32
    %c0_i32_0 = arith.constant 0 : i32
    %c0_i32_1 = arith.constant 0 : i32
    return %c0_i32, %c0_i32_0 : i32, i32
  }
  func.func @transform_9(%arg0: i32, %arg1: i32) -> (i32, i32) {
    %c0_i32 = arith.constant 0 : i32
    %c0_i32_0 = arith.constant 0 : i32
    %c0_i32_1 = arith.constant 0 : i32
    return %c0_i32, %c0_i32_0 : i32, i32
  }
  func.func @transform_10(%arg0: i32, %arg1: i32) -> (i32, i32) {
    %c0_i32 = arith.constant 0 : i32
    %c0_i32_0 = arith.constant 0 : i32
    %c0_i32_1 = arith.constant 0 : i32
    return %c0_i32, %c0_i32_0 : i32, i32
  }
  func.func @transform_11(%arg0: i32, %arg1: i32) -> (i32, i32) {
    %c0_i32 = arith.constant 0 : i32
    %c0_i32_0 = arith.constant 0 : i32
    %c0_i32_1 = arith.constant 0 : i32
    return %c0_i32, %c0_i32_0 : i32, i32
  }
  func.func @transform_12(%arg0: i32, %arg1: i32) -> (i32, i32) {
    %c0_i32 = arith.constant 0 : i32
    %c0_i32_0 = arith.constant 0 : i32
    %c0_i32_1 = arith.constant 0 : i32
    return %c0_i32, %c0_i32_0 : i32, i32
  }
  func.func @transform_13(%arg0: i32, %arg1: i32) -> (i32, i32) {
    %c0_i32 = arith.constant 0 : i32
    %c0_i32_0 = arith.constant 0 : i32
    %c0_i32_1 = arith.constant 0 : i32
    return %c0_i32, %c0_i32_0 : i32, i32
  }
  func.func @transform_14(%arg0: i32, %arg1: i32) -> (i32, i32) {
    %c0_i32 = arith.constant 0 : i32
    %c0_i32_0 = arith.constant 0 : i32
    return %arg0, %c0_i32 : i32, i32
  }
}

</mosaic_0001>

<llo_original>
// kernel: tpu_custom_call.1
$region0: #{tpu_custom_call.1}
  #allocation0 [shape = 'u32[]', space=smem, size = 0x4, offset = 0x4, fixed_abs, tag = 'smem constant byte address 0x4 - core index']
  #allocation1 [shape = 'u32[144,128]{1,0:T(1,128)}', space=vmem, size = 0x12000, scoped, tag = 'internal scratch']
  #allocation2 [shape = 'f32[2,512]{1,0:T(2,128)}', space=vmem, size = 0x1000, scoped, tag = 'scratch operand']
  %s0 = inlined_call_operand.vmem [shape: f32[2,8,16], index: 0, kind: input, shape index: {}]
  %s1 = inlined_call_operand.vmem [shape: f32[8,64], index: 1, kind: input, shape index: {}]
  %s2 = inlined_call_operand.vmem [shape: f32[1,64], index: 2, kind: input, shape index: {}]
  %s3 = inlined_call_operand.vmem [shape: bf16[64,128], index: 3, kind: input, shape index: {}]
  %s4 = inlined_call_operand.vmem [shape: f32[1,128], index: 4, kind: input, shape index: {}]
  %s5 = inlined_call_operand.hbm [shape: bf16[128,512], index: 5, kind: input, shape index: {}]
  %s6 = inlined_call_operand.vmem [shape: f32[1,512], index: 6, kind: input, shape index: {}]
  %s7 = inlined_call_operand.hbm [shape: bf16[512,128], index: 7, kind: input, shape index: {}]
  %s8 = inlined_call_operand.vmem [shape: f32[1,128], index: 8, kind: input, shape index: {}]
  %s9 = inlined_call_operand.vmem [shape: bf16[128,64], index: 9, kind: input, shape index: {}]
  %s10 = inlined_call_operand.vmem [shape: f32[1,64], index: 10, kind: input, shape index: {}]
  %s11 = inlined_call_operand.vmem [shape: bf16[64,9], index: 11, kind: input, shape index: {}]
  %s12 = inlined_call_operand.vmem [shape: f32[1,9], index: 12, kind: input, shape index: {}]
  %s13 = inlined_call_operand.vmem [shape: f32[1,9], index: 13, kind: input, shape index: {}]
  %s14 = inlined_call_operand.hbm [shape: f32[2,9], index: 14, kind: output, shape index: {}]
  %s15 = sld [smem:[#allocation0]]
  $region82: #{tpu_custom_call.1} parent=0
    _
  %s17 = ssub.s32 1, %s15
  %s18 = scalar_select 0, %s17, %s15
  $region1: #{tpu_custom_call.1} parent=0
    #allocation3 [shape = 'u8[131072]{0}', space=vmem, size = 0x20000, scoped, tag = 'input window, operand 5, single buffered']
    #allocation4 [shape = 's32[1]{0}', space=sflag, size = 0x4, scoped, tag = 'scoped memory for tpu_custom_call.1']
    #allocation5 [shape = 's32[1]{0}', space=sflag, size = 0x4, scoped, tag = 'scoped memory for tpu_custom_call.1']
    #allocation6 [shape = 'u8[131072]{0}', space=vmem, size = 0x20000, scoped, tag = 'input window, operand 7, single buffered']
    #allocation7 [shape = 's32[1]{0}', space=sflag, size = 0x4, scoped, tag = 'scoped memory for tpu_custom_call.1']
    #allocation8 [shape = 'u8[1024]{0}', space=vmem, size = 0x400, scoped, tag = 'output window, operand 0, single buffered']
    %19 = vsyncpa [#allocation4], 0
    %20 = vsyncpa [#allocation7], 0
    %21 = vsyncpa [#allocation5], 0
    // Predicated region
    $region2: #{tpu_custom_call.1} parent=1 // pred_check
      _
    $region3: #{tpu_custom_call.1} parent=1 // pred_check_branch
      %23 = sbr.rel (0) target = $region5
    $region4: #{tpu_custom_call.1} parent=1 // pred_region
      _
    $region5: #{tpu_custom_call.1} parent=1 // pred_fallthru
      _
    // Predicated region
    $region6: #{tpu_custom_call.1} parent=1 // pred_check
      _
    $region7: #{tpu_custom_call.1} parent=1 // pred_check_branch
      %25 = sbr.rel (0) target = $region9
    $region8: #{tpu_custom_call.1} parent=1 // pred_region
      _
    $region9: #{tpu_custom_call.1} parent=1 // pred_fallthru
      _
    // Predicated region
    $region10: #{tpu_custom_call.1} parent=1 // pred_check
      _
    $region11: #{tpu_custom_call.1} parent=1 // pred_check_branch
      %27 = sbr.rel (0) target = $region13
    $region12: #{tpu_custom_call.1} parent=1 // pred_region
      _
    $region13: #{tpu_custom_call.1} parent=1 // pred_fallthru
      _
    // Predicated region
    $region14: #{tpu_custom_call.1} parent=1 // pred_check
      _
    $region15: #{tpu_custom_call.1} parent=1 // pred_check_branch
      %29 = sbr.rel (0) target = $region17
    $region16: #{tpu_custom_call.1} parent=1 // pred_region
      _
    $region17: #{tpu_custom_call.1} parent=1 // pred_fallthru
      _
    // Predicated region
    $region18: #{tpu_custom_call.1} parent=1 // pred_check
      _
    $region19: #{tpu_custom_call.1} parent=1 // pred_check_branch
      %31 = sbr.rel (0) target = $region21
    $region20: #{tpu_custom_call.1} parent=1 // pred_region
      _
    $region21: #{tpu_custom_call.1} parent=1 // pred_fallthru
      _
    // Predicated region
    $region22: #{tpu_custom_call.1} parent=1 // pred_check
      _
    $region23: #{tpu_custom_call.1} parent=1 // pred_check_branch
      %33 = sbr.rel (0) target = $region25
    $region24: #{tpu_custom_call.1} parent=1 // pred_region
      %s35 = ssub.s32 4096, 4096
      %36 = vsyncadd [#allocation4], %s35
      %s37 = sshll.u32 [#allocation3], 4
      %s38 = int_to_ptr.vmem [resolvable:$true] %s37
      %43 = dma.hbm_to_vmem [thread:$0]  %s5, 4096, %s38, [#allocation4], 256, 256, 16
    $region25: #{tpu_custom_call.1} parent=1 // pred_fallthru
      _
    // Predicated region
    $region26: #{tpu_custom_call.1} parent=1 // pred_check
      _
    $region27: #{tpu_custom_call.1} parent=1 // pred_check_branch
      %45 = sbr.rel (0) target = $region29
    $region28: #{tpu_custom_call.1} parent=1 // pred_region
      _
    $region29: #{tpu_custom_call.1} parent=1 // pred_fallthru
      _
    // Predicated region
    $region30: #{tpu_custom_call.1} parent=1 // pred_check
      _
    $region31: #{tpu_custom_call.1} parent=1 // pred_check_branch
      %47 = sbr.rel (0) target = $region33
    $region32: #{tpu_custom_call.1} parent=1 // pred_region
      %s49 = ssub.s32 4096, 4096
      %50 = vsyncadd [#allocation7], %s49
      %s51 = sshll.u32 [#allocation6], 4
      %s52 = int_to_ptr.vmem [resolvable:$true] %s51
      %57 = dma.hbm_to_vmem [thread:$0]  %s7, 4096, %s52, [#allocation7], 64, 64, 4
    $region33: #{tpu_custom_call.1} parent=1 // pred_fallthru
      _
    // Predicated region
    $region34: #{tpu_custom_call.1} parent=1 // pred_check
      _
    $region35: #{tpu_custom_call.1} parent=1 // pred_check_branch
      %59 = sbr.rel (0) target = $region37
    $region36: #{tpu_custom_call.1} parent=1 // pred_region
      _
    $region37: #{tpu_custom_call.1} parent=1 // pred_fallthru
      _
    // Predicated region
    $region38: #{tpu_custom_call.1} parent=1 // pred_check
      _
    $region39: #{tpu_custom_call.1} parent=1 // pred_check_branch
      %61 = sbr.rel (0) target = $region41
    $region40: #{tpu_custom_call.1} parent=1 // pred_region
      _
    $region41: #{tpu_custom_call.1} parent=1 // pred_fallthru
      _
    // Predicated region
    $region42: #{tpu_custom_call.1} parent=1 // pred_check
      _
    $region43: #{tpu_custom_call.1} parent=1 // pred_check_branch
      %63 = sbr.rel (0) target = $region45
    $region44: #{tpu_custom_call.1} parent=1 // pred_region
      _
    $region45: #{tpu_custom_call.1} parent=1 // pred_fallthru
      _
    // Predicated region
    $region46: #{tpu_custom_call.1} parent=1 // pred_check
      _
    $region47: #{tpu_custom_call.1} parent=1 // pred_check_branch
      %65 = sbr.rel (0) target = $region49
    $region48: #{tpu_custom_call.1} parent=1 // pred_region
      _
    $region49: #{tpu_custom_call.1} parent=1 // pred_fallthru
      _
    // Predicated region
    $region50: #{tpu_custom_call.1} parent=1 // pred_check
      _
    $region51: #{tpu_custom_call.1} parent=1 // pred_check_branch
      %67 = sbr.rel (0) target = $region53
    $region52: #{tpu_custom_call.1} parent=1 // pred_region
      _
    $region53: #{tpu_custom_call.1} parent=1 // pred_fallthru
      _
    // Predicated region
    $region54: #{tpu_custom_call.1} parent=1 // pred_check
      _
    $region55: #{tpu_custom_call.1} parent=1 // pred_check_branch
      %69 = sbr.rel (0) target = $region57
    $region56: #{tpu_custom_call.1} parent=1 // pred_region
      _
    $region57: #{tpu_custom_call.1} parent=1 // pred_fallthru
      _
    // Predicated region
    $region58: #{tpu_custom_call.1} parent=1 // pred_check
      _
    $region59: #{tpu_custom_call.1} parent=1 // pred_check_branch
      %71 = sbr.rel (0) target = $region61
    $region60: #{tpu_custom_call.1} parent=1 // pred_region
      %72 = dma.done [#allocation4], 4096
    $region61: #{tpu_custom_call.1} parent=1 // pred_fallthru
      _
    // Predicated region
    $region62: #{tpu_custom_call.1} parent=1 // pred_check
      _
    $region63: #{tpu_custom_call.1} parent=1 // pred_check_branch
      %74 = sbr.rel (0) target = $region65
    $region64: #{tpu_custom_call.1} parent=1 // pred_region
      %75 = dma.done [#allocation7], 4096
    $region65: #{tpu_custom_call.1} parent=1 // pred_fallthru
      _
    %v77 = vld [vmem:[%s0] sm:$0xff]
    %v78 = vld [vmem:[%s0 + $0x8] sm:$0xff]
    %79 = vxpose.xlu0.b32.start [1/16] %v77, 128
    %80 = vxpose.xlu0.b32.cont [2/16] 0.0, 128
    %81 = vxpose.xlu0.b32.cont [3/16] 0.0, 128
    %82 = vxpose.xlu0.b32.cont [4/16] 0.0, 128
    %83 = vxpose.xlu0.b32.cont [5/16] 0.0, 128
    %84 = vxpose.xlu0.b32.cont [6/16] 0.0, 128
    %85 = vxpose.xlu0.b32.cont [7/16] 0.0, 128
    %86 = vxpose.xlu0.b32.cont [8/16] 0.0, 128
    %87 = vxpose.xlu0.b32.cont [9/16] 0.0, 128
    %88 = vxpose.xlu0.b32.cont [10/16] 0.0, 128
    %89 = vxpose.xlu0.b32.cont [11/16] 0.0, 128
    %90 = vxpose.xlu0.b32.cont [12/16] 0.0, 128
    %91 = vxpose.xlu0.b32.cont [13/16] 0.0, 128
    %92 = vxpose.xlu0.b32.cont [14/16] 0.0, 128
    %93 = vxpose.xlu0.b32.cont [15/16] 0.0, 128
    %94 = vxpose.xlu0.b32.end [16/16] 0.0, 128
    %v95 = vpop.trf.xlu0
    %v96 = vpop.trf.xlu0
    %v97 = vpop.trf.xlu0
    %v98 = vpop.trf.xlu0
    %v99 = vpop.trf.xlu0
    %v100 = vpop.trf.xlu0
    %v101 = vpop.trf.xlu0
    %v102 = vpop.trf.xlu0
    %v103 = vpop.trf.xlu0
    %v104 = vpop.trf.xlu0
    %v105 = vpop.trf.xlu0
    %v106 = vpop.trf.xlu0
    %v107 = vpop.trf.xlu0
    %v108 = vpop.trf.xlu0
    %v109 = vpop.trf.xlu0
    %v110 = vpop.trf.xlu0
    %111 = vxpose.xlu0.b32.start [1/16] %v78, 128
    %112 = vxpose.xlu0.b32.cont [2/16] 0.0, 128
    %113 = vxpose.xlu0.b32.cont [3/16] 0.0, 128
    %114 = vxpose.xlu0.b32.cont [4/16] 0.0, 128
    %115 = vxpose.xlu0.b32.cont [5/16] 0.0, 128
    %116 = vxpose.xlu0.b32.cont [6/16] 0.0, 128
    %117 = vxpose.xlu0.b32.cont [7/16] 0.0, 128
    %118 = vxpose.xlu0.b32.cont [8/16] 0.0, 128
    %119 = vxpose.xlu0.b32.cont [9/16] 0.0, 128
    %120 = vxpose.xlu0.b32.cont [10/16] 0.0, 128
    %121 = vxpose.xlu0.b32.cont [11/16] 0.0, 128
    %122 = vxpose.xlu0.b32.cont [12/16] 0.0, 128
    %123 = vxpose.xlu0.b32.cont [13/16] 0.0, 128
    %124 = vxpose.xlu0.b32.cont [14/16] 0.0, 128
    %125 = vxpose.xlu0.b32.cont [15/16] 0.0, 128
    %126 = vxpose.xlu0.b32.end [16/16] 0.0, 128
    %v127 = vpop.trf.xlu0
    %v128 = vpop.trf.xlu0
    %v129 = vpop.trf.xlu0
    %v130 = vpop.trf.xlu0
    %v131 = vpop.trf.xlu0
    %v132 = vpop.trf.xlu0
    %v133 = vpop.trf.xlu0
    %v134 = vpop.trf.xlu0
    %v135 = vpop.trf.xlu0
    %v136 = vpop.trf.xlu0
    %v137 = vpop.trf.xlu0
    %v138 = vpop.trf.xlu0
    %v139 = vpop.trf.xlu0
    %v140 = vpop.trf.xlu0
    %v141 = vpop.trf.xlu0
    %v142 = vpop.trf.xlu0
    %v143 = vld [vmem:[%s1] sm:$0xff]
    %v144 = vld [vmem:[%s2] sm:$0x1]
    %v146 = vlaneseq
    %v147 = vshrl.u32 %v146, 7
    %v148 = vsub.s32 0, %v147
    %v149 = vrot.slane %v144, %v148
    %vm151 = vcmask 64512
    %v153 = vsel %vm151, %v95, 0
    %v156 = vsel %vm151, %v96, 0
    %v159 = vsel %vm151, %v127, 0
    %v162 = vsel %vm151, %v128, 0
    %164 = vmatprep.subr.mxu0 0.0
    %165 = vmatpush1.msra.mxu0 %v143
    %166 = vmatprep.subr.mxu0 0.0
    %167 = vmatpush1.msra.mxu0 0.0
    %168 = vmatprep.subr.mxu0 0.0
    %169 = vmatpush1.msra.mxu0 0.0
    %170 = vmatprep.subr.mxu0 0.0
    %171 = vmatpush1.msra.mxu0 0.0
    %172 = vmatprep.subr.mxu0 0.0
    %173 = vmatpush1.msra.mxu0 0.0
    %174 = vmatprep.subr.mxu0 0.0
    %175 = vmatpush1.msra.mxu0 0.0
    %176 = vmatprep.subr.mxu0 0.0
    %177 = vmatpush1.msra.mxu0 0.0
    %178 = vmatprep.subr.mxu0 0.0
    %179 = vmatpush1.msra.mxu0 0.0
    %180 = vmatprep.subr.mxu0 0.0
    %181 = vmatpush1.msra.mxu0 0.0
    %182 = vmatprep.subr.mxu0 0.0
    %183 = vmatpush1.msra.mxu0 0.0
    %184 = vmatprep.subr.mxu0 0.0
    %185 = vmatpush1.msra.mxu0 0.0
    %186 = vmatprep.subr.mxu0 0.0
    %187 = vmatpush1.msra.mxu0 0.0
    %188 = vmatprep.subr.mxu0 0.0
    %189 = vmatpush1.msra.mxu0 0.0
    %190 = vmatprep.subr.mxu0 0.0
    %191 = vmatpush1.msra.mxu0 0.0
    %192 = vmatprep.subr.mxu0 0.0
    %193 = vmatpush1.msra.mxu0 0.0
    %194 = vmatprep.subr.mxu0 0.0
    %195 = vmatpush1.msra.mxu0 0.0
    %196 = vmatprep.subr.mxu0 0.0
    %197 = vmatpush1.msra.mxu0 0.0
    %198 = vmatprep.subr.mxu0 0.0
    %199 = vmatpush1.msra.mxu0 0.0
    %200 = vmatprep.subr.mxu0 0.0
    %201 = vmatpush1.msra.mxu0 0.0
    %202 = vmatprep.subr.mxu0 0.0
    %203 = vmatpush1.msra.mxu0 0.0
    %204 = vmatprep.subr.mxu0 0.0
    %205 = vmatpush1.msra.mxu0 0.0
    %206 = vmatprep.subr.mxu0 0.0
    %207 = vmatpush1.msra.mxu0 0.0
    %208 = vmatprep.subr.mxu0 0.0
    %209 = vmatpush1.msra.mxu0 0.0
    %210 = vmatprep.subr.mxu0 0.0
    %211 = vmatpush1.msra.mxu0 0.0
    %212 = vmatprep.subr.mxu0 0.0
    %213 = vmatpush1.msra.mxu0 0.0
    %214 = vmatprep.subr.mxu0 0.0
    %215 = vmatpush1.msra.mxu0 0.0
    %216 = vmatprep.subr.mxu0 0.0
    %217 = vmatpush1.msra.mxu0 0.0
    %218 = vmatprep.subr.mxu0 0.0
    %219 = vmatpush1.msra.mxu0 0.0
    %220 = vmatprep.subr.mxu0 0.0
    %221 = vmatpush1.msra.mxu0 0.0
    %222 = vmatprep.subr.mxu0 0.0
    %223 = vmatpush1.msra.mxu0 0.0
    %224 = vmatprep.subr.mxu0 0.0
    %225 = vmatpush1.msra.mxu0 0.0
    %226 = vmatprep.subr.mxu0 0.0
    %227 = vmatpush1.msra.mxu0 0.0
    %228 = vmatprep.mubr.f32.mxu0 0.0
    %229 = vmatmul.mubr.f32.gmra.mrb[0].mxu0 %v153
    %v230 = vpop.f32.mrb[0].mxu0
    %v231 = vadd.f32 %v149, %v230
    %v232 = vpop.f32.mrb[0].mxu0
    %233 = vmatprep.mubr.f32.mxu0 0.0
    %234 = vmatmul.mubr.f32.gmra.mrb[0].mxu0 %v156
    %v235 = vpop.f32.mrb[0].mxu0
    %v236 = vadd.f32 %v149, %v235
    %v237 = vpop.f32.mrb[0].mxu0
    %238 = vmatprep.mubr.f32.mxu0 0.0
    %239 = vmatmul.mubr.f32.gmra.mrb[0].mxu0 %v159
    %v240 = vpop.f32.mrb[0].mxu0
    %v241 = vadd.f32 %v149, %v240
    %v242 = vpop.f32.mrb[0].mxu0
    %243 = vmatprep.mubr.f32.mxu0 0.0
    %244 = vmatmul.mubr.f32.gmra.mrb[0].mxu0 %v162
    %v245 = vpop.f32.mrb[0].mxu0
    %v246 = vadd.f32 %v149, %v245
    %v247 = vpop.f32.mrb[0].mxu0
    %248 = vdwg.mxu0
    %v249 = vmax.f32 %v231, 0.0
    %v250 = vmax.f32 %v236, 0.0
    %v251 = vmax.f32 %v241, 0.0
    %v252 = vmax.f32 %v246, 0.0
    %v253 = vpack.c.bf16 %v250, %v249
    %v254 = vpack.c.bf16 %v252, %v251
    %v255 = vld [vmem:[%s3] sm:$0xf]
    %v256 = vld [vmem:[%s3 + $0x4] sm:$0xf]
    %v257 = vld [vmem:[%s3 + $0x8] sm:$0xf]
    %v258 = vld [vmem:[%s3 + $0xc] sm:$0xf]
    %v259 = vld [vmem:[%s3 + $0x10] sm:$0xf]
    %v260 = vld [vmem:[%s3 + $0x14] sm:$0xf]
    %v261 = vld [vmem:[%s3 + $0x18] sm:$0xf]
    %v262 = vld [vmem:[%s3 + $0x1c] sm:$0xf]
    %v263 = vld [vmem:[%s4] sm:$0x1]
    %v265 = vlaneseq
    %v266 = vshrl.u32 %v265, 7
    %v267 = vsub.s32 0, %v266
    %v268 = vrot.slane %v263, %v267
    %v278 = vunpack.c.l.b16 %v255
    %v279 = vunpack.c.l.b16 %v256
    %v280 = vunpack.c.l.b16 %v257
    %v281 = vunpack.c.l.b16 %v258
    %v282 = vunpack.c.l.b16 %v259
    %v283 = vunpack.c.l.b16 %v260
    %v284 = vunpack.c.l.b16 %v261
    %v285 = vunpack.c.l.b16 %v262
    %v286 = vpack.c.b16 %v279, %v278
    %v287 = vpack.c.b16 %v281, %v280
    %v288 = vpack.c.b16 %v283, %v282
    %v289 = vpack.c.b16 %v285, %v284
    %vm294 = vcmask 523264
    %v296 = vsel %vm294, %v253, 0
    %v299 = vsel %vm294, %v254, 0
    %301 = vmatprep.subr.bf16.mxu0 0
    %302 = vmatpush1.bf16.msra.mxu0 %v286
    %303 = vmatprep.subr.bf16.mxu0 0
    %304 = vmatpush1.bf16.msra.mxu0 %v287
    %305 = vmatprep.subr.bf16.mxu0 0
    %306 = vmatpush1.bf16.msra.mxu0 %v288
    %307 = vmatprep.subr.bf16.mxu0 0
    %308 = vmatpush1.bf16.msra.mxu0 %v289
    %309 = vmatprep.subr.bf16.mxu0 0
    %310 = vmatpush1.bf16.msra.mxu0 0
    %311 = vmatprep.subr.bf16.mxu0 0
    %312 = vmatpush1.bf16.msra.mxu0 0
    %313 = vmatprep.subr.bf16.mxu0 0
    %314 = vmatpush1.bf16.msra.mxu0 0
    %315 = vmatprep.subr.bf16.mxu0 0
    %316 = vmatpush1.bf16.msra.mxu0 0
    %317 = vmatprep.subr.bf16.mxu0 0
    %318 = vmatpush1.bf16.msra.mxu0 0
    %319 = vmatprep.subr.bf16.mxu0 0
    %320 = vmatpush1.bf16.msra.mxu0 0
    %321 = vmatprep.subr.bf16.mxu0 0
    %322 = vmatpush1.bf16.msra.mxu0 0
    %323 = vmatprep.subr.bf16.mxu0 0
    %324 = vmatpush1.bf16.msra.mxu0 0
    %325 = vmatprep.subr.bf16.mxu0 0
    %326 = vmatpush1.bf16.msra.mxu0 0
    %327 = vmatprep.subr.bf16.mxu0 0
    %328 = vmatpush1.bf16.msra.mxu0 0
    %329 = vmatprep.subr.bf16.mxu0 0
    %330 = vmatpush1.bf16.msra.mxu0 0
    %331 = vmatprep.subr.bf16.mxu0 0
    %332 = vmatpush1.bf16.msra.mxu0 0
    %333 = vmatprep.mubr.bf16.mxu0 0
    %334 = vmatmul.mubr.bf16.gmra.mrb[0].mxu0 %v296
    %v335 = vpop.f32.mrb[0].mxu0
    %v336 = vadd.f32 %v268, %v335
    %v337 = vpop.f32.mrb[0].mxu0
    %v338 = vpop.f32.mrb[0].mxu0
    %v339 = vadd.f32 %v268, %v338
    %v340 = vpop.f32.mrb[0].mxu0
    %341 = vmatprep.mubr.bf16.mxu0 0
    %342 = vmatmul.mubr.bf16.gmra.mrb[0].mxu0 %v299
    %v343 = vpop.f32.mrb[0].mxu0
    %v344 = vadd.f32 %v268, %v343
    %v345 = vpop.f32.mrb[0].mxu0
    %v346 = vpop.f32.mrb[0].mxu0
    %v347 = vadd.f32 %v268, %v346
    %v348 = vpop.f32.mrb[0].mxu0
    %349 = vdwg.mxu0
    %v350 = vmax.f32 %v336, 0.0
    %v351 = vmax.f32 %v339, 0.0
    %v352 = vmax.f32 %v344, 0.0
    %v353 = vmax.f32 %v347, 0.0
    %v354 = vpack.c.bf16 %v351, %v350
    %v355 = vpack.c.bf16 %v353, %v352
    %v356 = vld [vmem:[#allocation3] sm:$0xff]
    %v357 = vld [vmem:[#allocation3 + $0x8] sm:$0xff]
    %v358 = vld [vmem:[#allocation3 + $0x10] sm:$0xff]
    %v359 = vld [vmem:[#allocation3 + $0x18] sm:$0xff]
    %v360 = vld [vmem:[#allocation3 + $0x20] sm:$0xff]
    %v361 = vld [vmem:[#allocation3 + $0x28] sm:$0xff]
    %v362 = vld [vmem:[#allocation3 + $0x30] sm:$0xff]
    %v363 = vld [vmem:[#allocation3 + $0x38] sm:$0xff]
    %v364 = vld [vmem:[#allocation3 + $0x40] sm:$0xff]
    %v365 = vld [vmem:[#allocation3 + $0x48] sm:$0xff]
    %v366 = vld [vmem:[#allocation3 + $0x50] sm:$0xff]
    %v367 = vld [vmem:[#allocation3 + $0x58] sm:$0xff]
    %v368 = vld [vmem:[#allocation3 + $0x60] sm:$0xff]
    %v369 = vld [vmem:[#allocation3 + $0x68] sm:$0xff]
    %v370 = vld [vmem:[#allocation3 + $0x70] sm:$0xff]
    %v371 = vld [vmem:[#allocation3 + $0x78] sm:$0xff]
    %v372 = vld [vmem:[#allocation3 + $0x80] sm:$0xff]
    %v373 = vld [vmem:[#allocation3 + $0x88] sm:$0xff]
    %v374 = vld [vmem:[#allocation3 + $0x90] sm:$0xff]
    %v375 = vld [vmem:[#allocation3 + $0x98] sm:$0xff]
    %v376 = vld [vmem:[#allocation3 + $0xa0] sm:$0xff]
    %v377 = vld [vmem:[#allocation3 + $0xa8] sm:$0xff]
    %v378 = vld [vmem:[#allocation3 + $0xb0] sm:$0xff]
    %v379 = vld [vmem:[#allocation3 + $0xb8] sm:$0xff]
    %v380 = vld [vmem:[#allocation3 + $0xc0] sm:$0xff]
    %v381 = vld [vmem:[#allocation3 + $0xc8] sm:$0xff]
    %v382 = vld [vmem:[#allocation3 + $0xd0] sm:$0xff]
    %v383 = vld [vmem:[#allocation3 + $0xd8] sm:$0xff]
    %v384 = vld [vmem:[#allocation3 + $0xe0] sm:$0xff]
    %v385 = vld [vmem:[#allocation3 + $0xe8] sm:$0xff]
    %v386 = vld [vmem:[#allocation3 + $0xf0] sm:$0xff]
    %v387 = vld [vmem:[#allocation3 + $0xf8] sm:$0xff]
    %v420 = vunpack.c.l.b16 %v356
    %v421 = vunpack.c.h.b16 %v356
    %v422 = vunpack.c.l.b16 %v357
    %v423 = vunpack.c.h.b16 %v357
    %v424 = vunpack.c.l.b16 %v358
    %v425 = vunpack.c.h.b16 %v358
    %v426 = vunpack.c.l.b16 %v359
    %v427 = vunpack.c.h.b16 %v359
    %v428 = vunpack.c.l.b16 %v360
    %v429 = vunpack.c.h.b16 %v360
    %v430 = vunpack.c.l.b16 %v361
    %v431 = vunpack.c.h.b16 %v361
    %v432 = vunpack.c.l.b16 %v362
    %v433 = vunpack.c.h.b16 %v362
    %v434 = vunpack.c.l.b16 %v363
    %v435 = vunpack.c.h.b16 %v363
    %v436 = vunpack.c.l.b16 %v364
    %v437 = vunpack.c.h.b16 %v364
    %v438 = vunpack.c.l.b16 %v365
    %v439 = vunpack.c.h.b16 %v365
    %v440 = vunpack.c.l.b16 %v366
    %v441 = vunpack.c.h.b16 %v366
    %v442 = vunpack.c.l.b16 %v367
    %v443 = vunpack.c.h.b16 %v367
    %v444 = vunpack.c.l.b16 %v368
    %v445 = vunpack.c.h.b16 %v368
    %v446 = vunpack.c.l.b16 %v369
    %v447 = vunpack.c.h.b16 %v369
    %v448 = vunpack.c.l.b16 %v370
    %v449 = vunpack.c.h.b16 %v370
    %v450 = vunpack.c.l.b16 %v371
    %v451 = vunpack.c.h.b16 %v371
    %v452 = vunpack.c.l.b16 %v372
    %v453 = vunpack.c.h.b16 %v372
    %v454 = vunpack.c.l.b16 %v373
    %v455 = vunpack.c.h.b16 %v373
    %v456 = vunpack.c.l.b16 %v374
    %v457 = vunpack.c.h.b16 %v374
    %v458 = vunpack.c.l.b16 %v375
    %v459 = vunpack.c.h.b16 %v375
    %v460 = vunpack.c.l.b16 %v376
    %v461 = vunpack.c.h.b16 %v376
    %v462 = vunpack.c.l.b16 %v377
    %v463 = vunpack.c.h.b16 %v377
    %v464 = vunpack.c.l.b16 %v378
    %v465 = vunpack.c.h.b16 %v378
    %v466 = vunpack.c.l.b16 %v379
    %v467 = vunpack.c.h.b16 %v379
    %v468 = vunpack.c.l.b16 %v380
    %v469 = vunpack.c.h.b16 %v380
    %v470 = vunpack.c.l.b16 %v381
    %v471 = vunpack.c.h.b16 %v381
    %v472 = vunpack.c.l.b16 %v382
    %v473 = vunpack.c.h.b16 %v382
    %v474 = vunpack.c.l.b16 %v383
    %v475 = vunpack.c.h.b16 %v383
    %v476 = vunpack.c.l.b16 %v384
    %v477 = vunpack.c.h.b16 %v384
    %v478 = vunpack.c.l.b16 %v385
    %v479 = vunpack.c.h.b16 %v385
    %v480 = vunpack.c.l.b16 %v386
    %v481 = vunpack.c.h.b16 %v386
    %v482 = vunpack.c.l.b16 %v387
    %v483 = vunpack.c.h.b16 %v387
    %v484 = vpack.c.b16 %v424, %v420
    %v485 = vpack.c.b16 %v425, %v421
    %v486 = vpack.c.b16 %v426, %v422
    %v487 = vpack.c.b16 %v427, %v423
    %v488 = vpack.c.b16 %v432, %v428
    %v489 = vpack.c.b16 %v433, %v429
    %v490 = vpack.c.b16 %v434, %v430
    %v491 = vpack.c.b16 %v435, %v431
    %v492 = vpack.c.b16 %v440, %v436
    %v493 = vpack.c.b16 %v441, %v437
    %v494 = vpack.c.b16 %v442, %v438
    %v495 = vpack.c.b16 %v443, %v439
    %v496 = vpack.c.b16 %v448, %v444
    %v497 = vpack.c.b16 %v449, %v445
    %v498 = vpack.c.b16 %v450, %v446
    %v499 = vpack.c.b16 %v451, %v447
    %v500 = vpack.c.b16 %v456, %v452
    %v501 = vpack.c.b16 %v457, %v453
    %v502 = vpack.c.b16 %v458, %v454
    %v503 = vpack.c.b16 %v459, %v455
    %v504 = vpack.c.b16 %v464, %v460
    %v505 = vpack.c.b16 %v465, %v461
    %v506 = vpack.c.b16 %v466, %v462
    %v507 = vpack.c.b16 %v467, %v463
    %v508 = vpack.c.b16 %v472, %v468
    %v509 = vpack.c.b16 %v473, %v469
    %v510 = vpack.c.b16 %v474, %v470
    %v511 = vpack.c.b16 %v475, %v471
    %v512 = vpack.c.b16 %v480, %v476
    %v513 = vpack.c.b16 %v481, %v477
    %v514 = vpack.c.b16 %v482, %v478
    %v515 = vpack.c.b16 %v483, %v479
    %548 = vmatprep.subr.bf16.mxu0 %v485
    %549 = vmatpush1.bf16.msra.mxu0 %v484
    %550 = vmatprep.subr.bf16.mxu0 %v489
    %551 = vmatpush1.bf16.msra.mxu0 %v488
    %552 = vmatprep.subr.bf16.mxu0 %v493
    %553 = vmatpush1.bf16.msra.mxu0 %v492
    %554 = vmatprep.subr.bf16.mxu0 %v497
    %555 = vmatpush1.bf16.msra.mxu0 %v496
    %556 = vmatprep.subr.bf16.mxu0 %v501
    %557 = vmatpush1.bf16.msra.mxu0 %v500
    %558 = vmatprep.subr.bf16.mxu0 %v505
    %559 = vmatpush1.bf16.msra.mxu0 %v504
    %560 = vmatprep.subr.bf16.mxu0 %v509
    %561 = vmatpush1.bf16.msra.mxu0 %v508
    %562 = vmatprep.subr.bf16.mxu0 %v513
    %563 = vmatpush1.bf16.msra.mxu0 %v512
    %564 = vmatprep.subr.bf16.mxu0 0
    %565 = vmatpush1.bf16.msra.mxu0 0
    %566 = vmatprep.subr.bf16.mxu0 0
    %567 = vmatpush1.bf16.msra.mxu0 0
    %568 = vmatprep.subr.bf16.mxu0 0
    %569 = vmatpush1.bf16.msra.mxu0 0
    %570 = vmatprep.subr.bf16.mxu0 0
    %571 = vmatpush1.bf16.msra.mxu0 0
    %572 = vmatprep.subr.bf16.mxu0 0
    %573 = vmatpush1.bf16.msra.mxu0 0
    %574 = vmatprep.subr.bf16.mxu0 0
    %575 = vmatpush1.bf16.msra.mxu0 0
    %576 = vmatprep.subr.bf16.mxu0 0
    %577 = vmatpush1.bf16.msra.mxu0 0
    %578 = vmatprep.subr.bf16.mxu0 0
    %579 = vmatpush1.bf16.msra.mxu0 0
    %580 = vmatprep.mubr.bf16.mxu0 0
    %581 = vmatmul.mubr.bf16.gmra.mrb[0].mxu0 %v354
    %v582 = vpop.f32.mrb[0].mxu0
    %v583 = vadd.f32 0.0, %v582
    %v584 = vpop.f32.mrb[0].mxu0
    %v585 = vadd.f32 0.0, %v584
    %v586 = vpop.f32.mrb[0].mxu0
    %v587 = vadd.f32 0.0, %v586
    %v588 = vpop.f32.mrb[0].mxu0
    %v589 = vadd.f32 0.0, %v588
    %590 = vmatprep.mubr.bf16.mxu0 0
    %591 = vmatmul.mubr.bf16.gmra.mrb[0].mxu0 %v355
    %v592 = vpop.f32.mrb[0].mxu0
    %v593 = vadd.f32 0.0, %v592
    %v594 = vpop.f32.mrb[0].mxu0
    %v595 = vadd.f32 0.0, %v594
    %v596 = vpop.f32.mrb[0].mxu0
    %v597 = vadd.f32 0.0, %v596
    %v598 = vpop.f32.mrb[0].mxu0
    %v599 = vadd.f32 0.0, %v598
    %600 = vdwg.mxu0
    %601 = vmatprep.subr.bf16.mxu0 %v487
    %602 = vmatpush1.bf16.msra.mxu0 %v486
    %603 = vmatprep.subr.bf16.mxu0 %v491
    %604 = vmatpush1.bf16.msra.mxu0 %v490
    %605 = vmatprep.subr.bf16.mxu0 %v495
    %606 = vmatpush1.bf16.msra.mxu0 %v494
    %607 = vmatprep.subr.bf16.mxu0 %v499
    %608 = vmatpush1.bf16.msra.mxu0 %v498
    %609 = vmatprep.subr.bf16.mxu0 %v503
    %610 = vmatpush1.bf16.msra.mxu0 %v502
    %611 = vmatprep.subr.bf16.mxu0 %v507
    %612 = vmatpush1.bf16.msra.mxu0 %v506
    %613 = vmatprep.subr.bf16.mxu0 %v511
    %614 = vmatpush1.bf16.msra.mxu0 %v510
    %615 = vmatprep.subr.bf16.mxu0 %v515
    %616 = vmatpush1.bf16.msra.mxu0 %v514
    %617 = vmatprep.subr.bf16.mxu0 0
    %618 = vmatpush1.bf16.msra.mxu0 0
    %619 = vmatprep.subr.bf16.mxu0 0
    %620 = vmatpush1.bf16.msra.mxu0 0
    %621 = vmatprep.subr.bf16.mxu0 0
    %622 = vmatpush1.bf16.msra.mxu0 0
    %623 = vmatprep.subr.bf16.mxu0 0
    %624 = vmatpush1.bf16.msra.mxu0 0
    %625 = vmatprep.subr.bf16.mxu0 0
    %626 = vmatpush1.bf16.msra.mxu0 0
    %627 = vmatprep.subr.bf16.mxu0 0
    %628 = vmatpush1.bf16.msra.mxu0 0
    %629 = vmatprep.subr.bf16.mxu0 0
    %630 = vmatpush1.bf16.msra.mxu0 0
    %631 = vmatprep.subr.bf16.mxu0 0
    %632 = vmatpush1.bf16.msra.mxu0 0
    %633 = vmatprep.mubr.bf16.mxu0 0
    %634 = vmatmul.mubr.bf16.gmra.mrb[0].mxu0 %v354
    %v635 = vpop.f32.mrb[0].mxu0
    %v636 = vadd.f32 0.0, %v635
    %v637 = vpop.f32.mrb[0].mxu0
    %v638 = vadd.f32 0.0, %v637
    %v639 = vpop.f32.mrb[0].mxu0
    %v640 = vadd.f32 0.0, %v639
    %v641 = vpop.f32.mrb[0].mxu0
    %v642 = vadd.f32 0.0, %v641
    %643 = vmatprep.mubr.bf16.mxu0 0
    %644 = vmatmul.mubr.bf16.gmra.mrb[0].mxu0 %v355
    %v645 = vpop.f32.mrb[0].mxu0
    %v646 = vadd.f32 0.0, %v645
    %v647 = vpop.f32.mrb[0].mxu0
    %v648 = vadd.f32 0.0, %v647
    %v649 = vpop.f32.mrb[0].mxu0
    %v650 = vadd.f32 0.0, %v649
    %v651 = vpop.f32.mrb[0].mxu0
    %v652 = vadd.f32 0.0, %v651
    %653 = vdwg.mxu0
    %p654 = scmp.eq.s32.totalorder 0, 0
    // Predicated region
    $region66: #{tpu_custom_call.1} parent=1 // pred_check
      %p655 = pneg %p654
    $region67: #{tpu_custom_call.1} parent=1 // pred_check_branch
      %657 = sbr.rel (%p655) target = $region69
    $region68: #{tpu_custom_call.1} parent=1 // pred_region
      %658 = vst [vmem:[#allocation2] sm:$0xff] -inf
    $region69: #{tpu_custom_call.1} parent=1 // pred_fallthru
      _
    %v659 = vld [vmem:[#allocation2] sm:$0xff]
    %v660 = vmax.f32 %v583, %v587
    %v661 = vrot.slane %v660, 4
    %v662 = vmax.f32 %v660, %v661
    %v663 = vrot.slane %v662, 2
    %v664 = vmax.f32 %v662, %v663
    %v665 = vrot.slane %v664, 1
    %v666 = vmax.f32 %v664, %v665
    %v667 = vmax.f32 %v585, %v589
    %v668 = vrot.slane %v667, 4
    %v669 = vmax.f32 %v667, %v668
    %v670 = vrot.slane %v669, 2
    %v671 = vmax.f32 %v669, %v670
    %v672 = vrot.slane %v671, 1
    %v673 = vmax.f32 %v671, %v672
    %v674 = vmax.f32 %v636, %v640
    %v675 = vrot.slane %v674, 4
    %v676 = vmax.f32 %v674, %v675
    %v677 = vrot.slane %v676, 2
    %v678 = vmax.f32 %v676, %v677
    %v679 = vrot.slane %v678, 1
    %v680 = vmax.f32 %v678, %v679
    %v681 = vmax.f32 %v638, %v642
    %v682 = vrot.slane %v681, 4
    %v683 = vmax.f32 %v681, %v682
    %v684 = vrot.slane %v683, 2
    %v685 = vmax.f32 %v683, %v684
    %v686 = vrot.slane %v685, 1
    %v687 = vmax.f32 %v685, %v686
    %v688 = vmax.f32 %v593, %v597
    %v689 = vrot.slane %v688, 4
    %v690 = vmax.f32 %v688, %v689
    %v691 = vrot.slane %v690, 2
    %v692 = vmax.f32 %v690, %v691
    %v693 = vrot.slane %v692, 1
    %v694 = vmax.f32 %v692, %v693
    %v695 = vmax.f32 %v595, %v599
    %v696 = vrot.slane %v695, 4
    %v697 = vmax.f32 %v695, %v696
    %v698 = vrot.slane %v697, 2
    %v699 = vmax.f32 %v697, %v698
    %v700 = vrot.slane %v699, 1
    %v701 = vmax.f32 %v699, %v700
    %v702 = vmax.f32 %v646, %v650
    %v703 = vrot.slane %v702, 4
    %v704 = vmax.f32 %v702, %v703
    %v705 = vrot.slane %v704, 2
    %v706 = vmax.f32 %v704, %v705
    %v707 = vrot.slane %v706, 1
    %v708 = vmax.f32 %v706, %v707
    %v709 = vmax.f32 %v648, %v652
    %v710 = vrot.slane %v709, 4
    %v711 = vmax.f32 %v709, %v710
    %v712 = vrot.slane %v711, 2
    %v713 = vmax.f32 %v711, %v712
    %v714 = vrot.slane %v713, 1
    %v715 = vmax.f32 %v713, %v714
    %v724 = vcombine.low %v666, %v673
    %v725 = vcombine.low %v680, %v687
    %v727 = vunpack.c.l.s4 1983009808
    %v728 = vunpack.c.0.s8 %v727
    %v729 = vlaneseq
    %v730 = vshrl.u32 %v729, 7
    %v731 = vsub.s32 %v728, %v730
    %v732 = vrot.slane %v724, %v731
    %v734 = vunpack.c.l.s4 1983009808
    %v735 = vunpack.c.0.s8 %v734
    %v736 = vlaneseq
    %v737 = vshrl.u32 %v736, 7
    %v738 = vsub.s32 %v735, %v737
    %v739 = vrot.slane %v725, %v738
    %v740 = vcombine.low %v732, %v739
    %v741 = vcombine.low %v694, %v701
    %v742 = vcombine.low %v708, %v715
    %v744 = vunpack.c.l.s4 1983009808
    %v745 = vunpack.c.0.s8 %v744
    %v746 = vlaneseq
    %v747 = vshrl.u32 %v746, 7
    %v748 = vsub.s32 %v745, %v747
    %v749 = vrot.slane %v741, %v748
    %v751 = vunpack.c.l.s4 1983009808
    %v752 = vunpack.c.0.s8 %v751
    %v753 = vlaneseq
    %v754 = vshrl.u32 %v753, 7
    %v755 = vsub.s32 %v752, %v754
    %v756 = vrot.slane %v742, %v755
    %v757 = vcombine.low %v749, %v756
    %vm758 = vcmask 1044484
    %v759 = vsel %vm758, %v740, %v740
    %vm760 = vcmask 1046534
    %v761 = vsel %vm760, %v740, %v759
    %v762 = vrot.slane %v757, 7
    %vm763 = vcmask 1041409
    %v764 = vsel %vm763, %v762, %v761
    %vm765 = vcmask 1043459
    %v766 = vsel %vm765, %v762, %v764
    %vm767 = vcmask 1045509
    %v768 = vsel %vm767, %v762, %v766
    %vm769 = vcmask 1047559
    %v770 = vsel %vm769, %v762, %v768
    %v772 = vmax.f32 %v659, %v770
    %773 = vst [vmem:[#allocation2] sm:$0xff] %v772
    // Predicated region
    $region70: #{tpu_custom_call.1} parent=1 // pred_check
      %p774 = pneg %p654
    $region71: #{tpu_custom_call.1} parent=1 // pred_check_branch
      %776 = sbr.rel (%p774) target = $region73
    $region72: #{tpu_custom_call.1} parent=1 // pred_region
      %v777 = vld [vmem:[#allocation2] sm:$0xff]
      %v778 = vld [vmem:[%s6] sm:$0xf]
      %v780 = vlaneseq
      %v781 = vshrl.u32 %v780, 7
      %v782 = vsub.s32 0, %v781
      %v783 = vrot.slane %v778, %v782
      %v784 = vlaneseq
      %v785 = vshrl.u32 %v784, 7
      %v786 = vsub.s32 1, %v785
      %v787 = vrot.slane %v778, %v786
      %v788 = vlaneseq
      %v789 = vshrl.u32 %v788, 7
      %v790 = vsub.s32 2, %v789
      %v791 = vrot.slane %v778, %v790
      %v792 = vlaneseq
      %v793 = vshrl.u32 %v792, 7
      %v794 = vsub.s32 3, %v793
      %v795 = vrot.slane %v778, %v794
      %v796 = vcombine.low %v783, %v787
      %v797 = vcombine.low %v791, %v795
      %v799 = vunpack.c.l.s4 1983009808
      %v800 = vunpack.c.0.s8 %v799
      %v801 = vlaneseq
      %v802 = vshrl.u32 %v801, 7
      %v803 = vsub.s32 %v800, %v802
      %v804 = vrot.slane %v796, %v803
      %v806 = vunpack.c.l.s4 1983009808
      %v807 = vunpack.c.0.s8 %v806
      %v808 = vlaneseq
      %v809 = vshrl.u32 %v808, 7
      %v810 = vsub.s32 %v807, %v809
      %v811 = vrot.slane %v797, %v810
      %v812 = vcombine.low %v804, %v811
      %v814 = vadd.f32 %v777, %v812
      %v815 = vmax.f32 %v814, 0.0
      %v817 = vcombine.high %v815, %v815
      %v819 = vunpack.c.l.s4 1983009808
      %v820 = vunpack.c.0.s8 %v819
      %v821 = vlaneseq
      %v822 = vshrl.u32 %v821, 7
      %v823 = vsub.s32 %v820, %v822
      %v824 = vrot.slane %v815, %v823
      %v826 = vunpack.c.l.s4 1983009808
      %v827 = vunpack.c.0.s8 %v826
      %v828 = vlaneseq
      %v829 = vshrl.u32 %v828, 7
      %v830 = vsub.s32 %v827, %v829
      %v831 = vrot.slane %v817, %v830
      %v832 = vcombine.high %v824, %v824
      %v833 = vcombine.high %v831, %v831
      %v838 = vpack.c.bf16 %v824, %v824
      %v839 = vpack.c.bf16 %v832, %v832
      %v840 = vpack.c.bf16 %v831, %v831
      %v841 = vpack.c.bf16 %v833, %v833
      %v842 = vld [vmem:[#allocation6] sm:$0xf]
      %v843 = vld [vmem:[#allocation6 + $0x4] sm:$0xf]
      %v844 = vld [vmem:[#allocation6 + $0x8] sm:$0xf]
      %v845 = vld [vmem:[#allocation6 + $0xc] sm:$0xf]
      %v846 = vld [vmem:[#allocation6 + $0x10] sm:$0xf]
      %v847 = vld [vmem:[#allocation6 + $0x14] sm:$0xf]
      %v848 = vld [vmem:[#allocation6 + $0x18] sm:$0xf]
      %v849 = vld [vmem:[#allocation6 + $0x1c] sm:$0xf]
      %v850 = vld [vmem:[#allocation6 + $0x20] sm:$0xf]
      %v851 = vld [vmem:[#allocation6 + $0x24] sm:$0xf]
      %v852 = vld [vmem:[#allocation6 + $0x28] sm:$0xf]
      %v853 = vld [vmem:[#allocation6 + $0x2c] sm:$0xf]
      %v854 = vld [vmem:[#allocation6 + $0x30] sm:$0xf]
      %v855 = vld [vmem:[#allocation6 + $0x34] sm:$0xf]
      %v856 = vld [vmem:[#allocation6 + $0x38] sm:$0xf]
      %v857 = vld [vmem:[#allocation6 + $0x3c] sm:$0xf]
      %v858 = vld [vmem:[#allocation6 + $0x40] sm:$0xf]
      %v859 = vld [vmem:[#allocation6 + $0x44] sm:$0xf]
      %v860 = vld [vmem:[#allocation6 + $0x48] sm:$0xf]
      %v861 = vld [vmem:[#allocation6 + $0x4c] sm:$0xf]
      %v862 = vld [vmem:[#allocation6 + $0x50] sm:$0xf]
      %v863 = vld [vmem:[#allocation6 + $0x54] sm:$0xf]
      %v864 = vld [vmem:[#allocation6 + $0x58] sm:$0xf]
      %v865 = vld [vmem:[#allocation6 + $0x5c] sm:$0xf]
      %v866 = vld [vmem:[#allocation6 + $0x60] sm:$0xf]
      %v867 = vld [vmem:[#allocation6 + $0x64] sm:$0xf]
      %v868 = vld [vmem:[#allocation6 + $0x68] sm:$0xf]
      %v869 = vld [vmem:[#allocation6 + $0x6c] sm:$0xf]
      %v870 = vld [vmem:[#allocation6 + $0x70] sm:$0xf]
      %v871 = vld [vmem:[#allocation6 + $0x74] sm:$0xf]
      %v872 = vld [vmem:[#allocation6 + $0x78] sm:$0xf]
      %v873 = vld [vmem:[#allocation6 + $0x7c] sm:$0xf]
      %v874 = vld [vmem:[#allocation6 + $0x80] sm:$0xf]
      %v875 = vld [vmem:[#allocation6 + $0x84] sm:$0xf]
      %v876 = vld [vmem:[#allocation6 + $0x88] sm:$0xf]
      %v877 = vld [vmem:[#allocation6 + $0x8c] sm:$0xf]
      %v878 = vld [vmem:[#allocation6 + $0x90] sm:$0xf]
      %v879 = vld [vmem:[#allocation6 + $0x94] sm:$0xf]
      %v880 = vld [vmem:[#allocation6 + $0x98] sm:$0xf]
      %v881 = vld [vmem:[#allocation6 + $0x9c] sm:$0xf]
      %v882 = vld [vmem:[#allocation6 + $0xa0] sm:$0xf]
      %v883 = vld [vmem:[#allocation6 + $0xa4] sm:$0xf]
      %v884 = vld [vmem:[#allocation6 + $0xa8] sm:$0xf]
      %v885 = vld [vmem:[#allocation6 + $0xac] sm:$0xf]
      %v886 = vld [vmem:[#allocation6 + $0xb0] sm:$0xf]
      %v887 = vld [vmem:[#allocation6 + $0xb4] sm:$0xf]
      %v888 = vld [vmem:[#allocation6 + $0xb8] sm:$0xf]
      %v889 = vld [vmem:[#allocation6 + $0xbc] sm:$0xf]
      %v890 = vld [vmem:[#allocation6 + $0xc0] sm:$0xf]
      %v891 = vld [vmem:[#allocation6 + $0xc4] sm:$0xf]
      %v892 = vld [vmem:[#allocation6 + $0xc8] sm:$0xf]
      %v893 = vld [vmem:[#allocation6 + $0xcc] sm:$0xf]
      %v894 = vld [vmem:[#allocation6 + $0xd0] sm:$0xf]
      %v895 = vld [vmem:[#allocation6 + $0xd4] sm:$0xf]
      %v896 = vld [vmem:[#allocation6 + $0xd8] sm:$0xf]
      %v897 = vld [vmem:[#allocation6 + $0xdc] sm:$0xf]
      %v898 = vld [vmem:[#allocation6 + $0xe0] sm:$0xf]
      %v899 = vld [vmem:[#allocation6 + $0xe4] sm:$0xf]
      %v900 = vld [vmem:[#allocation6 + $0xe8] sm:$0xf]
      %v901 = vld [vmem:[#allocation6 + $0xec] sm:$0xf]
      %v902 = vld [vmem:[#allocation6 + $0xf0] sm:$0xf]
      %v903 = vld [vmem:[#allocation6 + $0xf4] sm:$0xf]
      %v904 = vld [vmem:[#allocation6 + $0xf8] sm:$0xf]
      %v905 = vld [vmem:[#allocation6 + $0xfc] sm:$0xf]
      %v906 = vld [vmem:[%s8] sm:$0x1]
      %v908 = vlaneseq
      %v909 = vshrl.u32 %v908, 7
      %v910 = vsub.s32 0, %v909
      %v911 = vrot.slane %v906, %v910
      %v977 = vunpack.c.l.b16 %v842
      %v978 = vunpack.c.l.b16 %v843
      %v979 = vunpack.c.l.b16 %v844
      %v980 = vunpack.c.l.b16 %v845
      %v981 = vunpack.c.l.b16 %v846
      %v982 = vunpack.c.l.b16 %v847
      %v983 = vunpack.c.l.b16 %v848
      %v984 = vunpack.c.l.b16 %v849
      %v985 = vunpack.c.l.b16 %v850
      %v986 = vunpack.c.l.b16 %v851
      %v987 = vunpack.c.l.b16 %v852
      %v988 = vunpack.c.l.b16 %v853
      %v989 = vunpack.c.l.b16 %v854
      %v990 = vunpack.c.l.b16 %v855
      %v991 = vunpack.c.l.b16 %v856
      %v992 = vunpack.c.l.b16 %v857
      %v993 = vunpack.c.l.b16 %v858
      %v994 = vunpack.c.l.b16 %v859
      %v995 = vunpack.c.l.b16 %v860
      %v996 = vunpack.c.l.b16 %v861
      %v997 = vunpack.c.l.b16 %v862
      %v998 = vunpack.c.l.b16 %v863
      %v999 = vunpack.c.l.b16 %v864
      %v1000 = vunpack.c.l.b16 %v865
      %v1001 = vunpack.c.l.b16 %v866
      %v1002 = vunpack.c.l.b16 %v867
      %v1003 = vunpack.c.l.b16 %v868
      %v1004 = vunpack.c.l.b16 %v869
      %v1005 = vunpack.c.l.b16 %v870
      %v1006 = vunpack.c.l.b16 %v871
      %v1007 = vunpack.c.l.b16 %v872
      %v1008 = vunpack.c.l.b16 %v873
      %v1009 = vunpack.c.l.b16 %v874
      %v1010 = vunpack.c.l.b16 %v875
      %v1011 = vunpack.c.l.b16 %v876
      %v1012 = vunpack.c.l.b16 %v877
      %v1013 = vunpack.c.l.b16 %v878
      %v1014 = vunpack.c.l.b16 %v879
      %v1015 = vunpack.c.l.b16 %v880
      %v1016 = vunpack.c.l.b16 %v881
      %v1017 = vunpack.c.l.b16 %v882
      %v1018 = vunpack.c.l.b16 %v883
      %v1019 = vunpack.c.l.b16 %v884
      %v1020 = vunpack.c.l.b16 %v885
      %v1021 = vunpack.c.l.b16 %v886
      %v1022 = vunpack.c.l.b16 %v887
      %v1023 = vunpack.c.l.b16 %v888
      %v1024 = vunpack.c.l.b16 %v889
      %v1025 = vunpack.c.l.b16 %v890
      %v1026 = vunpack.c.l.b16 %v891
      %v1027 = vunpack.c.l.b16 %v892
      %v1028 = vunpack.c.l.b16 %v893
      %v1029 = vunpack.c.l.b16 %v894
      %v1030 = vunpack.c.l.b16 %v895
      %v1031 = vunpack.c.l.b16 %v896
      %v1032 = vunpack.c.l.b16 %v897
      %v1033 = vunpack.c.l.b16 %v898
      %v1034 = vunpack.c.l.b16 %v899
      %v1035 = vunpack.c.l.b16 %v900
      %v1036 = vunpack.c.l.b16 %v901
      %v1037 = vunpack.c.l.b16 %v902
      %v1038 = vunpack.c.l.b16 %v903
      %v1039 = vunpack.c.l.b16 %v904
      %v1040 = vunpack.c.l.b16 %v905
      %v1041 = vpack.c.b16 %v978, %v977
      %v1042 = vpack.c.b16 %v980, %v979
      %v1043 = vpack.c.b16 %v982, %v981
      %v1044 = vpack.c.b16 %v984, %v983
      %v1045 = vpack.c.b16 %v986, %v985
      %v1046 = vpack.c.b16 %v988, %v987
      %v1047 = vpack.c.b16 %v990, %v989
      %v1048 = vpack.c.b16 %v992, %v991
      %v1049 = vpack.c.b16 %v994, %v993
      %v1050 = vpack.c.b16 %v996, %v995
      %v1051 = vpack.c.b16 %v998, %v997
      %v1052 = vpack.c.b16 %v1000, %v999
      %v1053 = vpack.c.b16 %v1002, %v1001
      %v1054 = vpack.c.b16 %v1004, %v1003
      %v1055 = vpack.c.b16 %v1006, %v1005
      %v1056 = vpack.c.b16 %v1008, %v1007
      %v1057 = vpack.c.b16 %v1010, %v1009
      %v1058 = vpack.c.b16 %v1012, %v1011
      %v1059 = vpack.c.b16 %v1014, %v1013
      %v1060 = vpack.c.b16 %v1016, %v1015
      %v1061 = vpack.c.b16 %v1018, %v1017
      %v1062 = vpack.c.b16 %v1020, %v1019
      %v1063 = vpack.c.b16 %v1022, %v1021
      %v1064 = vpack.c.b16 %v1024, %v1023
      %v1065 = vpack.c.b16 %v1026, %v1025
      %v1066 = vpack.c.b16 %v1028, %v1027
      %v1067 = vpack.c.b16 %v1030, %v1029
      %v1068 = vpack.c.b16 %v1032, %v1031
      %v1069 = vpack.c.b16 %v1034, %v1033
      %v1070 = vpack.c.b16 %v1036, %v1035
      %v1071 = vpack.c.b16 %v1038, %v1037
      %v1072 = vpack.c.b16 %v1040, %v1039
      %1105 = vmatprep.subr.bf16.mxu0 0
      %1106 = vmatpush1.bf16.msra.mxu0 %v1041
      %1107 = vmatprep.subr.bf16.mxu0 0
      %1108 = vmatpush1.bf16.msra.mxu0 %v1042
      %1109 = vmatprep.subr.bf16.mxu0 0
      %1110 = vmatpush1.bf16.msra.mxu0 %v1043
      %1111 = vmatprep.subr.bf16.mxu0 0
      %1112 = vmatpush1.bf16.msra.mxu0 %v1044
      %1113 = vmatprep.subr.bf16.mxu0 0
      %1114 = vmatpush1.bf16.msra.mxu0 %v1045
      %1115 = vmatprep.subr.bf16.mxu0 0
      %1116 = vmatpush1.bf16.msra.mxu0 %v1046
      %1117 = vmatprep.subr.bf16.mxu0 0
      %1118 = vmatpush1.bf16.msra.mxu0 %v1047
      %1119 = vmatprep.subr.bf16.mxu0 0
      %1120 = vmatpush1.bf16.msra.mxu0 %v1048
      %1121 = vmatprep.subr.bf16.mxu0 0
      %1122 = vmatpush1.bf16.msra.mxu0 %v1049
      %1123 = vmatprep.subr.bf16.mxu0 0
      %1124 = vmatpush1.bf16.msra.mxu0 %v1050
      %1125 = vmatprep.subr.bf16.mxu0 0
      %1126 = vmatpush1.bf16.msra.mxu0 %v1051
      %1127 = vmatprep.subr.bf16.mxu0 0
      %1128 = vmatpush1.bf16.msra.mxu0 %v1052
      %1129 = vmatprep.subr.bf16.mxu0 0
      %1130 = vmatpush1.bf16.msra.mxu0 %v1053
      %1131 = vmatprep.subr.bf16.mxu0 0
      %1132 = vmatpush1.bf16.msra.mxu0 %v1054
      %1133 = vmatprep.subr.bf16.mxu0 0
      %1134 = vmatpush1.bf16.msra.mxu0 %v1055
      %1135 = vmatprep.subr.bf16.mxu0 0
      %1136 = vmatpush1.bf16.msra.mxu0 %v1056
      %1137 = vmatprep.mubr.bf16.mxu0 %v839
      %1138 = vmatmul.mubr.bf16.gmra.mrb[0].mxu0 %v838
      %v1139 = vpop.f32.mrb[0].mxu0
      %v1140 = vadd.f32 %v911, %v1139
      %v1141 = vpop.f32.mrb[0].mxu0
      %v1142 = vpop.f32.mrb[0].mxu0
      %v1143 = vpop.f32.mrb[0].mxu0
      %1144 = vdwg.mxu0
      %1145 = vmatprep.subr.bf16.mxu0 0
      %1146 = vmatpush1.bf16.msra.mxu0 %v1057
      %1147 = vmatprep.subr.bf16.mxu0 0
      %1148 = vmatpush1.bf16.msra.mxu0 %v1058
      %1149 = vmatprep.subr.bf16.mxu0 0
      %1150 = vmatpush1.bf16.msra.mxu0 %v1059
      %1151 = vmatprep.subr.bf16.mxu0 0
      %1152 = vmatpush1.bf16.msra.mxu0 %v1060
      %1153 = vmatprep.subr.bf16.mxu0 0
      %1154 = vmatpush1.bf16.msra.mxu0 %v1061
      %1155 = vmatprep.subr.bf16.mxu0 0
      %1156 = vmatpush1.bf16.msra.mxu0 %v1062
      %1157 = vmatprep.subr.bf16.mxu0 0
      %1158 = vmatpush1.bf16.msra.mxu0 %v1063
      %1159 = vmatprep.subr.bf16.mxu0 0
      %1160 = vmatpush1.bf16.msra.mxu0 %v1064
      %1161 = vmatprep.subr.bf16.mxu0 0
      %1162 = vmatpush1.bf16.msra.mxu0 %v1065
      %1163 = vmatprep.subr.bf16.mxu0 0
      %1164 = vmatpush1.bf16.msra.mxu0 %v1066
      %1165 = vmatprep.subr.bf16.mxu0 0
      %1166 = vmatpush1.bf16.msra.mxu0 %v1067
      %1167 = vmatprep.subr.bf16.mxu0 0
      %1168 = vmatpush1.bf16.msra.mxu0 %v1068
      %1169 = vmatprep.subr.bf16.mxu0 0
      %1170 = vmatpush1.bf16.msra.mxu0 %v1069
      %1171 = vmatprep.subr.bf16.mxu0 0
      %1172 = vmatpush1.bf16.msra.mxu0 %v1070
      %1173 = vmatprep.subr.bf16.mxu0 0
      %1174 = vmatpush1.bf16.msra.mxu0 %v1071
      %1175 = vmatprep.subr.bf16.mxu0 0
      %1176 = vmatpush1.bf16.msra.mxu0 %v1072
      %1177 = vmatprep.mubr.bf16.mxu0 %v841
      %1178 = vmatmul.mubr.bf16.gmra.mrb[0].mxu0 %v840
      %v1179 = vpop.f32.mrb[0].mxu0
      %v1180 = vadd.f32 %v1140, %v1179
      %v1181 = vpop.f32.mrb[0].mxu0
      %v1182 = vpop.f32.mrb[0].mxu0
      %v1183 = vpop.f32.mrb[0].mxu0
      %1184 = vdwg.mxu0
      %v1185 = vmax.f32 %v1180, 0.0
      %v1186 = vpack.c.bf16 %v1185, %v1185
      %v1187 = vld [vmem:[%s9] sm:$0xf]
      %v1188 = vld [vmem:[%s9 + $0x4] sm:$0xf]
      %v1189 = vld [vmem:[%s9 + $0x8] sm:$0xf]
      %v1190 = vld [vmem:[%s9 + $0xc] sm:$0xf]
      %v1191 = vld [vmem:[%s9 + $0x10] sm:$0xf]
      %v1192 = vld [vmem:[%s9 + $0x14] sm:$0xf]
      %v1193 = vld [vmem:[%s9 + $0x18] sm:$0xf]
      %v1194 = vld [vmem:[%s9 + $0x1c] sm:$0xf]
      %v1195 = vld [vmem:[%s9 + $0x20] sm:$0xf]
      %v1196 = vld [vmem:[%s9 + $0x24] sm:$0xf]
      %v1197 = vld [vmem:[%s9 + $0x28] sm:$0xf]
      %v1198 = vld [vmem:[%s9 + $0x2c] sm:$0xf]
      %v1199 = vld [vmem:[%s9 + $0x30] sm:$0xf]
      %v1200 = vld [vmem:[%s9 + $0x34] sm:$0xf]
      %v1201 = vld [vmem:[%s9 + $0x38] sm:$0xf]
      %v1202 = vld [vmem:[%s9 + $0x3c] sm:$0xf]
      %v1203 = vld [vmem:[%s10] sm:$0x1]
      %v1205 = vlaneseq
      %v1206 = vshrl.u32 %v1205, 7
      %v1207 = vsub.s32 0, %v1206
      %v1208 = vrot.slane %v1203, %v1207
      %v1226 = vunpack.c.l.b16 %v1187
      %v1227 = vunpack.c.l.b16 %v1188
      %v1228 = vunpack.c.l.b16 %v1189
      %v1229 = vunpack.c.l.b16 %v1190
      %v1230 = vunpack.c.l.b16 %v1191
      %v1231 = vunpack.c.l.b16 %v1192
      %v1232 = vunpack.c.l.b16 %v1193
      %v1233 = vunpack.c.l.b16 %v1194
      %v1234 = vunpack.c.l.b16 %v1195
      %v1235 = vunpack.c.l.b16 %v1196
      %v1236 = vunpack.c.l.b16 %v1197
      %v1237 = vunpack.c.l.b16 %v1198
      %v1238 = vunpack.c.l.b16 %v1199
      %v1239 = vunpack.c.l.b16 %v1200
      %v1240 = vunpack.c.l.b16 %v1201
      %v1241 = vunpack.c.l.b16 %v1202
      %v1242 = vpack.c.b16 %v1227, %v1226
      %v1243 = vpack.c.b16 %v1229, %v1228
      %v1244 = vpack.c.b16 %v1231, %v1230
      %v1245 = vpack.c.b16 %v1233, %v1232
      %v1246 = vpack.c.b16 %v1235, %v1234
      %v1247 = vpack.c.b16 %v1237, %v1236
      %v1248 = vpack.c.b16 %v1239, %v1238
      %v1249 = vpack.c.b16 %v1241, %v1240
      %1258 = vmatprep.subr.bf16.mxu0 0
      %1259 = vmatpush1.bf16.msra.mxu0 %v1242
      %1260 = vmatprep.subr.bf16.mxu0 0
      %1261 = vmatpush1.bf16.msra.mxu0 %v1243
      %1262 = vmatprep.subr.bf16.mxu0 0
      %1263 = vmatpush1.bf16.msra.mxu0 %v1244
      %1264 = vmatprep.subr.bf16.mxu0 0
      %1265 = vmatpush1.bf16.msra.mxu0 %v1245
      %1266 = vmatprep.subr.bf16.mxu0 0
      %1267 = vmatpush1.bf16.msra.mxu0 %v1246
      %1268 = vmatprep.subr.bf16.mxu0 0
      %1269 = vmatpush1.bf16.msra.mxu0 %v1247
      %1270 = vmatprep.subr.bf16.mxu0 0
      %1271 = vmatpush1.bf16.msra.mxu0 %v1248
      %1272 = vmatprep.subr.bf16.mxu0 0
      %1273 = vmatpush1.bf16.msra.mxu0 %v1249
      %1274 = vmatprep.subr.bf16.mxu0 0
      %1275 = vmatpush1.bf16.msra.mxu0 0
      %1276 = vmatprep.subr.bf16.mxu0 0
      %1277 = vmatpush1.bf16.msra.mxu0 0
      %1278 = vmatprep.subr.bf16.mxu0 0
      %1279 = vmatpush1.bf16.msra.mxu0 0
      %1280 = vmatprep.subr.bf16.mxu0 0
      %1281 = vmatpush1.bf16.msra.mxu0 0
      %1282 = vmatprep.subr.bf16.mxu0 0
      %1283 = vmatpush1.bf16.msra.mxu0 0
      %1284 = vmatprep.subr.bf16.mxu0 0
      %1285 = vmatpush1.bf16.msra.mxu0 0
      %1286 = vmatprep.subr.bf16.mxu0 0
      %1287 = vmatpush1.bf16.msra.mxu0 0
      %1288 = vmatprep.subr.bf16.mxu0 0
      %1289 = vmatpush1.bf16.msra.mxu0 0
      %1290 = vmatprep.mubr.bf16.mxu0 0
      %1291 = vmatmul.mubr.bf16.gmra.mrb[0].mxu0 %v1186
      %v1292 = vpop.f32.mrb[0].mxu0
      %v1293 = vadd.f32 %v1208, %v1292
      %v1294 = vpop.f32.mrb[0].mxu0
      %v1295 = vpop.f32.mrb[0].mxu0
      %v1296 = vpop.f32.mrb[0].mxu0
      %1297 = vdwg.mxu0
      %v1298 = vmax.f32 %v1293, 0.0
      %v1299 = vpack.c.bf16 %v1298, %v1298
      %v1300 = vld [vmem:[%s11] sm:$0xf]
      %v1301 = vld [vmem:[%s11 + $0x4] sm:$0xf]
      %v1302 = vld [vmem:[%s11 + $0x8] sm:$0xf]
      %v1303 = vld [vmem:[%s11 + $0xc] sm:$0xf]
      %v1304 = vld [vmem:[%s11 + $0x10] sm:$0xf]
      %v1305 = vld [vmem:[%s11 + $0x14] sm:$0xf]
      %v1306 = vld [vmem:[%s11 + $0x18] sm:$0xf]
      %v1307 = vld [vmem:[%s11 + $0x1c] sm:$0xf]
      %v1308 = vld [vmem:[%s12] sm:$0x1]
      %v1310 = vlaneseq
      %v1311 = vshrl.u32 %v1310, 7
      %v1312 = vsub.s32 0, %v1311
      %v1313 = vrot.slane %v1308, %v1312
      %v1323 = vunpack.c.l.b16 %v1300
      %v1324 = vunpack.c.l.b16 %v1301
      %v1325 = vunpack.c.l.b16 %v1302
      %v1326 = vunpack.c.l.b16 %v1303
      %v1327 = vunpack.c.l.b16 %v1304
      %v1328 = vunpack.c.l.b16 %v1305
      %v1329 = vunpack.c.l.b16 %v1306
      %v1330 = vunpack.c.l.b16 %v1307
      %v1331 = vpack.c.b16 %v1324, %v1323
      %v1332 = vpack.c.b16 %v1326, %v1325
      %v1333 = vpack.c.b16 %v1328, %v1327
      %v1334 = vpack.c.b16 %v1330, %v1329
      %v1340 = vsel %vm294, %v1299, 0
      %1342 = vmatprep.subr.bf16.mxu0 0
      %1343 = vmatpush1.bf16.msra.mxu0 %v1331
      %1344 = vmatprep.subr.bf16.mxu0 0
      %1345 = vmatpush1.bf16.msra.mxu0 %v1332
      %1346 = vmatprep.subr.bf16.mxu0 0
      %1347 = vmatpush1.bf16.msra.mxu0 %v1333
      %1348 = vmatprep.subr.bf16.mxu0 0
      %1349 = vmatpush1.bf16.msra.mxu0 %v1334
      %1350 = vmatprep.subr.bf16.mxu0 0
      %1351 = vmatpush1.bf16.msra.mxu0 0
      %1352 = vmatprep.subr.bf16.mxu0 0
      %1353 = vmatpush1.bf16.msra.mxu0 0
      %1354 = vmatprep.subr.bf16.mxu0 0
      %1355 = vmatpush1.bf16.msra.mxu0 0
      %1356 = vmatprep.subr.bf16.mxu0 0
      %1357 = vmatpush1.bf16.msra.mxu0 0
      %1358 = vmatprep.subr.bf16.mxu0 0
      %1359 = vmatpush1.bf16.msra.mxu0 0
      %1360 = vmatprep.subr.bf16.mxu0 0
      %1361 = vmatpush1.bf16.msra.mxu0 0
      %1362 = vmatprep.subr.bf16.mxu0 0
      %1363 = vmatpush1.bf16.msra.mxu0 0
      %1364 = vmatprep.subr.bf16.mxu0 0
      %1365 = vmatpush1.bf16.msra.mxu0 0
      %1366 = vmatprep.subr.bf16.mxu0 0
      %1367 = vmatpush1.bf16.msra.mxu0 0
      %1368 = vmatprep.subr.bf16.mxu0 0
      %1369 = vmatpush1.bf16.msra.mxu0 0
      %1370 = vmatprep.subr.bf16.mxu0 0
      %1371 = vmatpush1.bf16.msra.mxu0 0
      %1372 = vmatprep.subr.bf16.mxu0 0
      %1373 = vmatpush1.bf16.msra.mxu0 0
      %1374 = vmatprep.mubr.bf16.mxu0 0
      %1375 = vmatmul.mubr.bf16.gmra.mrb[0].mxu0 %v1340
      %v1376 = vpop.f32.mrb[0].mxu0
      %v1377 = vadd.f32 %v1313, %v1376
      %v1378 = vpop.f32.mrb[0].mxu0
      %v1379 = vpop.f32.mrb[0].mxu0
      %v1380 = vpop.f32.mrb[0].mxu0
      %1381 = vdwg.mxu0
      %v1382 = vld [vmem:[%s13] sm:$0x1]
      %v1384 = vlaneseq
      %v1385 = vshrl.u32 %v1384, 7
      %v1386 = vsub.s32 0, %v1385
      %v1387 = vrot.slane %v1382, %v1386
      %v1389 = vadd.f32 %v1377, %v1387
      %vm1390 = vcmask 66560
      %1391 = vst.msk [vmem:[#allocation8] sm:$0x3] %vm1390, %v1389
    $region73: #{tpu_custom_call.1} parent=1 // pred_fallthru
      _
    // Predicated region
    $region74: #{tpu_custom_call.1} parent=1 // pred_check
      _
    $region75: #{tpu_custom_call.1} parent=1 // pred_check_branch
      %1393 = sbr.rel (0) target = $region77
    $region76: #{tpu_custom_call.1} parent=1 // pred_region
      %s1395 = ssub.s32 32, 32
      %1396 = vsyncadd [#allocation5], %s1395
      %s1398 = sshll.u32 [#allocation8], 4
      %s1399 = int_to_ptr.vmem [resolvable:$true] %s1398
      %1401 = dma.vmem_to_hbm [thread:$0]  %s1399, 32, %s14, [#allocation5]
    $region77: #{tpu_custom_call.1} parent=1 // pred_fallthru
      _
    // Predicated region
    $region78: #{tpu_custom_call.1} parent=1 // pred_check
      _
    $region79: #{tpu_custom_call.1} parent=1 // pred_check_branch
      %1403 = sbr.rel (0) target = $region81
    $region80: #{tpu_custom_call.1} parent=1 // pred_region
      %1404 = dma.done [#allocation5], 32
    $region81: #{tpu_custom_call.1} parent=1 // pred_fallthru
      _
    %1405 = vsyncpa [#allocation4], 1
    %1406 = vsyncpa [#allocation7], 1
    %1407 = vsyncpa [#allocation5], 1

</llo_original>
